<compile_context>
chip_gen: v5e
topology: v5e:2x2
jax: 0.10.0
libtpu: 0.0.40
codegen_flags: <defaults>
</compile_context>

<pallas_src>
import jax
import jax.numpy as jnp
from jax.experimental import pallas as pl
from jax.experimental.pallas import tpu as pltpu

_LANE = 128                   # channel tile = one full lane width
_TARGET_STRIP_PIXELS = 4096   # ~2 MiB of f32 per (strip x 128-channel) block


def _dwconv_kernel(x_ref, ht_ref, hb_ref, w_ref, b_ref, o_ref, acc_ref):
    # x_ref : (1, TH, W, CT)  input strip (one batch, one channel tile)
    # ht_ref: (1, 1,  W, CT)  row just above the strip (zeros at the top edge)
    # hb_ref: (1, 1,  W, CT)  row just below the strip (zeros at the bottom edge)
    # w_ref : (3, 3, CT)      depthwise weights, (kh, kw, channel)
    # b_ref : (1, 1, CT)      bias
    # o_ref : (1, TH, W, CT)  output strip
    # acc_ref: (TH, W, CT)    f32 accumulator scratch
    _, TH, W, CT = x_ref.shape
    f32 = jnp.float32

    w = w_ref[...].astype(f32)           # (3, 3, CT) -- loaded once per block
    bias = b_ref[0, 0, :].astype(f32)    # (CT,)

    # Small (1, W, 1) column mask; jnp.where broadcasts it (no full-tile iota).
    col = jax.lax.broadcasted_iota(jnp.int32, (1, W, 1), 1)
    lmask = col >= 1       # output col w reads input col w-1 (zero at w == 0)
    rmask = col <= W - 2   # output col w reads input col w+1 (zero at w == W-1)

    def row_taps(v, w_row):
        # v: (rows, W, CT) f32; w_row: (3, CT). Sum of the 3 column taps for
        # one kernel row. +/-1 column shifts via sublane roll on the XLU so the
        # shifted data stays in vregs instead of round-tripping VMEM.
        out = v * w_row[1]
        out = out + jnp.where(lmask, pltpu.roll(v, 1, axis=1), 0.0) * w_row[0]
        out = out + jnp.where(rmask, pltpu.roll(v, W - 1, axis=1), 0.0) * w_row[2]
        return out

    x = x_ref[0].astype(f32)             # (TH, W, CT)

    # Center kernel row over all output rows; accumulator initialized with bias.
    acc_ref[...] = row_taps(x, w[1]) + bias

    # Row-above tap (kh = 0) and row-below tap (kh = 2): interior rows read a
    # shifted leading-dim slice of the strip; the edge rows read the halos.
    if TH > 1:
        acc_ref[1:, :, :] += row_taps(x[:TH - 1], w[0])
        acc_ref[:TH - 1, :, :] += row_taps(x[1:], w[2])
    acc_ref[0:1, :, :] += row_taps(ht_ref[0].astype(f32), w[0])
    acc_ref[TH - 1:TH, :, :] += row_taps(hb_ref[0].astype(f32), w[2])

    o_ref[0] = acc_ref[...].astype(o_ref.dtype)


def _pick_tile_h(H, W):
    """Largest divisor of H giving <= ~_TARGET_STRIP_PIXELS pixels per strip."""
    target = max(1, _TARGET_STRIP_PIXELS // max(W, 1))
    if H <= target:
        return H
    th = 1
    for d in range(1, target + 1):
        if H % d == 0:
            th = d
    return th


def dwconv_forward(x, weight, bias, H, W, *, tile_h=None):
    """x: (B, N, C), N == H*W.  weight: (C, 1, 3, 3) PyTorch layout.  bias: (C,)."""
    B, N, C = x.shape
    assert N == H * W

    TH = tile_h if tile_h is not None else _pick_tile_h(H, W)
    assert H % TH == 0
    nH = H // TH

    # Layout glue (plain JAX, no spatial padding of the full tensor).
    x_nhwc = x.reshape(B, H, W, C)
    w_hwc = jnp.transpose(weight[:, 0, :, :], (1, 2, 0))   # (3, 3, C)
    b_11c = bias.reshape(1, 1, C)

    # Pad channels to a multiple of 128 (typical dims, e.g. 768, need none).
    CT = _LANE
    C_pad = ((C + CT - 1) // CT) * CT
    if C_pad != C:
        pad = C_pad - C
        x_nhwc = jnp.pad(x_nhwc, ((0, 0), (0, 0), (0, 0), (0, pad)))
        w_hwc = jnp.pad(w_hwc, ((0, 0), (0, 0), (0, pad)))
        b_11c = jnp.pad(b_11c, ((0, 0), (0, 0), (0, pad)))

    # Per-strip 1-row halos (tiny strided row gathers + zero edge rows).
    zrow = jnp.zeros((B, 1, W, C_pad), x_nhwc.dtype)
    halo_top = jnp.concatenate(
        [zrow, x_nhwc[:, TH - 1::TH, :, :][:, :nH - 1]], axis=1)   # (B, nH, W, C_pad)
    halo_bot = jnp.concatenate(
        [x_nhwc[:, TH::TH, :, :], zrow], axis=1)                   # (B, nH, W, C_pad)

    # Explicit VMEM budget: double-buffered input + output strip blocks, the
    # f32 accumulator, and headroom for in-body temporaries / halos / weights.
    io_bytes = x.dtype.itemsize
    tile_io = TH * W * CT * io_bytes
    tile_f32 = TH * W * CT * 4
    budget = 4 * tile_io + 6 * tile_f32 + (4 << 20)
    vmem_limit = int(min(48 << 20, max(24 << 20, budget)))

    # TODO(synk): for tiny B*C*nH grids (< ~8 steps) batch more images per call
    # to keep both v7x TensorCores and the BlockSpec pipeline busy.
    grid = (C_pad // CT, B, nH)

    out = pl.pallas_call(
        _dwconv_kernel,
        out_shape=jax.ShapeDtypeStruct((B, H, W, C_pad), x.dtype),
        grid_spec=pltpu.PrefetchScalarGridSpec(
            num_scalar_prefetch=0,
            grid=grid,
            in_specs=[
                pl.BlockSpec((1, TH, W, CT), lambda c, b, h: (b, h, 0, c)),
                pl.BlockSpec((1, 1, W, CT), lambda c, b, h: (b, h, 0, c)),
                pl.BlockSpec((1, 1, W, CT), lambda c, b, h: (b, h, 0, c)),
                pl.BlockSpec((3, 3, CT), lambda c, b, h: (0, 0, c)),
                pl.BlockSpec((1, 1, CT), lambda c, b, h: (0, 0, c)),
            ],
            out_specs=pl.BlockSpec((1, TH, W, CT), lambda c, b, h: (b, h, 0, c)),
            scratch_shapes=[pltpu.VMEM((TH, W, CT), jnp.float32)],
        ),
        compiler_params=pltpu.CompilerParams(
            dimension_semantics=("parallel", "parallel", "parallel"),
            vmem_limit_bytes=vmem_limit,
        ),
    )(x_nhwc, halo_top, halo_bot, w_hwc, b_11c)

    if C_pad != C:
        out = out[..., :C]
    return out.reshape(B, N, C)


def _reference(x, weight, bias, H, W):
    """Pure-JAX reference mirroring the PyTorch forward (NCHW depthwise conv)."""
    B, N, C = x.shape
    x_nchw = jnp.transpose(x, (0, 2, 1)).reshape(B, C, H, W)
    out = jax.lax.conv_general_dilated(
        x_nchw, weight,
        window_strides=(1, 1), padding=((1, 1), (1, 1)),
        dimension_numbers=("NCHW", "OIHW", "NCHW"),
        feature_group_count=C,
    ) + bias.reshape(1, C, 1, 1)
    return jnp.transpose(out.reshape(B, C, N), (0, 2, 1))


if __name__ == "__main__":
    key = jax.random.PRNGKey(0)
    kx, kw, kb = jax.random.split(key, 3)

    # Main config: lane-dense channel count, single H strip.
    B, C, H, W = 2, 128, 16, 16
    N = H * W
    x = jax.random.normal(kx, (B, N, C), dtype=jnp.float32)
    weight = jax.random.normal(kw, (C, 1, 3, 3), dtype=jnp.float32) * 0.1
    bias = jax.random.normal(kb, (C,), dtype=jnp.float32) * 0.1

    out = jax.block_until_ready(dwconv_forward(x, weight, bias, H, W))
    ref = _reference(x, weight, bias, H, W)
    assert out.shape == (B, N, C)
    assert jnp.allclose(out, ref, atol=1e-4, rtol=1e-4), "mismatch (C=128, single strip)"

    # H-strip path: 4 strips of 4 rows, exercises the 1-row halo handling.
    out_s = jax.block_until_ready(dwconv_forward(x, weight, bias, H, W, tile_h=4))
    assert jnp.allclose(out_s, ref, atol=1e-4, rtol=1e-4), "mismatch (H strips)"

    # Small-C path (wrapper pads channels 32 -> 128).
    C2 = 32
    x2 = jax.random.normal(kx, (B, N, C2), dtype=jnp.float32)
    w2 = jax.random.normal(kw, (C2, 1, 3, 3), dtype=jnp.float32) * 0.1
    b2 = jax.random.normal(kb, (C2,), dtype=jnp.float32) * 0.1
    out2 = jax.block_until_ready(dwconv_forward(x2, w2, b2, H, W))
    assert jnp.allclose(out2, _reference(x2, w2, b2, H, W), atol=1e-4, rtol=1e-4), \
        "mismatch (C=32)"

    # bf16 I/O path (halves HBM traffic; accumulation stays f32 in-kernel).
    xb = x.astype(jnp.bfloat16)
    wb = weight.astype(jnp.bfloat16)
    bb = bias.astype(jnp.bfloat16)
    outb = jax.block_until_ready(dwconv_forward(xb, wb, bb, H, W))
    refb = _reference(xb.astype(jnp.float32), wb.astype(jnp.float32),
                      bb.astype(jnp.float32), H, W)
    assert outb.dtype == jnp.bfloat16
    assert jnp.allclose(outb.astype(jnp.float32), refb, atol=3e-2, rtol=3e-2), \
        "mismatch (bf16 I/O)"

    print("KERNEL_OK")
</pallas_src>

<mosaic_0001>
module attributes {stable_mosaic.version = 11 : i64} {
  func.func @_dwconv_kernel(%arg0: i32, %arg1: i32, %arg2: i32, %arg3: memref<1x16x16x128xf32, #tpu.memory_space<vmem>>, %arg4: memref<1x1x16x128xf32, #tpu.memory_space<vmem>>, %arg5: memref<1x1x16x128xf32, #tpu.memory_space<vmem>>, %arg6: memref<3x3x128xf32, #tpu.memory_space<vmem>>, %arg7: memref<1x1x128xf32, #tpu.memory_space<vmem>>, %arg8: memref<1x16x16x128xf32, #tpu.memory_space<vmem>>, %arg9: memref<16x16x128xf32, #tpu.memory_space<vmem>>) attributes {dimension_semantics = [#tpu.dimension_semantics<parallel>, #tpu.dimension_semantics<parallel>, #tpu.dimension_semantics<parallel>], iteration_bounds = array<i64: 1, 2, 1>, scalar_prefetch = 0 : i64, scratch_operands = 1 : i64, tpu.core_type = #tpu.core_type<tc>, window_params = [{transform_indices = @transform_0, window_bounds = array<i64: 1, 16, 16, 128>}, {transform_indices = @transform_1, window_bounds = array<i64: 1, 1, 16, 128>}, {transform_indices = @transform_2, window_bounds = array<i64: 1, 1, 16, 128>}, {transform_indices = @transform_3, window_bounds = array<i64: 3, 3, 128>}, {transform_indices = @transform_4, window_bounds = array<i64: 1, 1, 128>}, {transform_indices = @transform_5, window_bounds = array<i64: 1, 16, 16, 128>}]} {
    %c0 = arith.constant 0 : index
    %c0_0 = arith.constant 0 : index
    %c0_1 = arith.constant 0 : index
    %0 = vector.load %arg6[%c0, %c0_0, %c0_1] : memref<3x3x128xf32, #tpu.memory_space<vmem>>, vector<3x3x128xf32>
    %c0_2 = arith.constant 0 : index
    %c0_3 = arith.constant 0 : index
    %c0_4 = arith.constant 0 : index
    %1 = vector.load %arg7[%c0_2, %c0_3, %c0_4] : memref<1x1x128xf32, #tpu.memory_space<vmem>>, vector<1x1x128xf32>
    %2 = vector.shape_cast %1 : vector<1x1x128xf32> to vector<128xf32>
    %3 = tpu.iota {dimensions = array<i32: 1>} : vector<1x16x1xi32>
    %c1_i32 = arith.constant 1 : i32
    %4 = vector.broadcast %c1_i32 : i32 to vector<1x16x1xi32>
    %5 = arith.cmpi sge, %3, %4 : vector<1x16x1xi32>
    %c14_i32 = arith.constant 14 : i32
    %6 = vector.broadcast %c14_i32 : i32 to vector<1x16x1xi32>
    %7 = arith.cmpi sle, %3, %6 : vector<1x16x1xi32>
    %c0_5 = arith.constant 0 : index
    %c0_6 = arith.constant 0 : index
    %c0_7 = arith.constant 0 : index
    %c0_8 = arith.constant 0 : index
    %8 = vector.load %arg3[%c0_5, %c0_6, %c0_7, %c0_8] : memref<1x16x16x128xf32, #tpu.memory_space<vmem>>, vector<1x16x16x128xf32>
    %9 = vector.shape_cast %8 : vector<1x16x16x128xf32> to vector<16x16x128xf32>
    %10 = vector.extract_strided_slice %0 {offsets = [1, 0, 0], sizes = [1, 3, 128], strides = [1, 1, 1]} : vector<3x3x128xf32> to vector<1x3x128xf32>
    %11 = vector.shape_cast %10 : vector<1x3x128xf32> to vector<3x128xf32>
    %12 = vector.extract_strided_slice %11 {offsets = [1, 0], sizes = [1, 128], strides = [1, 1]} : vector<3x128xf32> to vector<1x128xf32>
    %13 = vector.shape_cast %12 : vector<1x128xf32> to vector<128xf32>
    %14 = vector.shape_cast %13 : vector<128xf32> to vector<1x1x128xf32>
    %15 = vector.broadcast %14 : vector<1x1x128xf32> to vector<16x16x128xf32>
    %16 = arith.mulf %9, %15 : vector<16x16x128xf32>
    %c1_i32_9 = arith.constant 1 : i32
    %17 = tpu.dynamic_rotate %9 by %c1_i32_9 dim 1 : vector<16x16x128xf32>, i32 -> vector<16x16x128xf32>
    %cst = arith.constant 0.000000e+00 : f32
    %18 = vector.shape_cast %5 : vector<1x16x1xi1> to vector<1x16x1xi1>
    %19 = vector.broadcast %18 : vector<1x16x1xi1> to vector<16x16x128xi1>
    %20 = vector.broadcast %cst : f32 to vector<16x16x128xf32>
    %21 = arith.select %19, %17, %20 : vector<16x16x128xi1>, vector<16x16x128xf32>
    %22 = vector.extract_strided_slice %11 {offsets = [0, 0], sizes = [1, 128], strides = [1, 1]} : vector<3x128xf32> to vector<1x128xf32>
    %23 = vector.shape_cast %22 : vector<1x128xf32> to vector<128xf32>
    %24 = vector.shape_cast %23 : vector<128xf32> to vector<1x1x128xf32>
    %25 = vector.broadcast %24 : vector<1x1x128xf32> to vector<16x16x128xf32>
    %26 = arith.mulf %21, %25 : vector<16x16x128xf32>
    %27 = arith.addf %16, %26 : vector<16x16x128xf32>
    %c15_i32 = arith.constant 15 : i32
    %28 = tpu.dynamic_rotate %9 by %c15_i32 dim 1 : vector<16x16x128xf32>, i32 -> vector<16x16x128xf32>
    %cst_10 = arith.constant 0.000000e+00 : f32
    %29 = vector.shape_cast %7 : vector<1x16x1xi1> to vector<1x16x1xi1>
    %30 = vector.broadcast %29 : vector<1x16x1xi1> to vector<16x16x128xi1>
    %31 = vector.broadcast %cst_10 : f32 to vector<16x16x128xf32>
    %32 = arith.select %30, %28, %31 : vector<16x16x128xi1>, vector<16x16x128xf32>
    %33 = vector.extract_strided_slice %11 {offsets = [2, 0], sizes = [1, 128], strides = [1, 1]} : vector<3x128xf32> to vector<1x128xf32>
    %34 = vector.shape_cast %33 : vector<1x128xf32> to vector<128xf32>
    %35 = vector.shape_cast %34 : vector<128xf32> to vector<1x1x128xf32>
    %36 = vector.broadcast %35 : vector<1x1x128xf32> to vector<16x16x128xf32>
    %37 = arith.mulf %32, %36 : vector<16x16x128xf32>
    %38 = arith.addf %27, %37 : vector<16x16x128xf32>
    %39 = vector.shape_cast %2 : vector<128xf32> to vector<1x1x128xf32>
    %40 = vector.broadcast %39 : vector<1x1x128xf32> to vector<16x16x128xf32>
    %41 = arith.addf %38, %40 : vector<16x16x128xf32>
    %c0_11 = arith.constant 0 : index
    %c0_12 = arith.constant 0 : index
    %c0_13 = arith.constant 0 : index
    %42 = vector.load %arg9[%c0_11, %c0_12, %c0_13] : memref<16x16x128xf32, #tpu.memory_space<vmem>>, vector<16x16x128xf32>
    tpu.vector_store %arg9[%c0_11, %c0_12, %c0_13], %41 {strides = array<i32>} : memref<16x16x128xf32, #tpu.memory_space<vmem>>, vector<16x16x128xf32>,
    %c1 = arith.constant 1 : index
    %c0_14 = arith.constant 0 : index
    %c0_15 = arith.constant 0 : index
    %43 = vector.load %arg9[%c1, %c0_14, %c0_15] : memref<16x16x128xf32, #tpu.memory_space<vmem>>, vector<15x16x128xf32>
    %44 = vector.extract_strided_slice %9 {offsets = [0, 0, 0], sizes = [15, 16, 128], strides = [1, 1, 1]} : vector<16x16x128xf32> to vector<15x16x128xf32>
    %45 = vector.extract_strided_slice %0 {offsets = [0, 0, 0], sizes = [1, 3, 128], strides = [1, 1, 1]} : vector<3x3x128xf32> to vector<1x3x128xf32>
    %46 = vector.shape_cast %45 : vector<1x3x128xf32> to vector<3x128xf32>
    %47 = vector.extract_strided_slice %46 {offsets = [1, 0], sizes = [1, 128], strides = [1, 1]} : vector<3x128xf32> to vector<1x128xf32>
    %48 = vector.shape_cast %47 : vector<1x128xf32> to vector<128xf32>
    %49 = vector.shape_cast %48 : vector<128xf32> to vector<1x1x128xf32>
    %50 = vector.broadcast %49 : vector<1x1x128xf32> to vector<15x16x128xf32>
    %51 = arith.mulf %44, %50 : vector<15x16x128xf32>
    %c1_i32_16 = arith.constant 1 : i32
    %52 = tpu.dynamic_rotate %44 by %c1_i32_16 dim 1 : vector<15x16x128xf32>, i32 -> vector<15x16x128xf32>
    %cst_17 = arith.constant 0.000000e+00 : f32
    %53 = vector.shape_cast %5 : vector<1x16x1xi1> to vector<1x16x1xi1>
    %54 = vector.broadcast %53 : vector<1x16x1xi1> to vector<15x16x128xi1>
    %55 = vector.broadcast %cst_17 : f32 to vector<15x16x128xf32>
    %56 = arith.select %54, %52, %55 : vector<15x16x128xi1>, vector<15x16x128xf32>
    %57 = vector.extract_strided_slice %46 {offsets = [0, 0], sizes = [1, 128], strides = [1, 1]} : vector<3x128xf32> to vector<1x128xf32>
    %58 = vector.shape_cast %57 : vector<1x128xf32> to vector<128xf32>
    %59 = vector.shape_cast %58 : vector<128xf32> to vector<1x1x128xf32>
    %60 = vector.broadcast %59 : vector<1x1x128xf32> to vector<15x16x128xf32>
    %61 = arith.mulf %56, %60 : vector<15x16x128xf32>
    %62 = arith.addf %51, %61 : vector<15x16x128xf32>
    %c15_i32_18 = arith.constant 15 : i32
    %63 = tpu.dynamic_rotate %44 by %c15_i32_18 dim 1 : vector<15x16x128xf32>, i32 -> vector<15x16x128xf32>
    %cst_19 = arith.constant 0.000000e+00 : f32
    %64 = vector.shape_cast %7 : vector<1x16x1xi1> to vector<1x16x1xi1>
    %65 = vector.broadcast %64 : vector<1x16x1xi1> to vector<15x16x128xi1>
    %66 = vector.broadcast %cst_19 : f32 to vector<15x16x128xf32>
    %67 = arith.select %65, %63, %66 : vector<15x16x128xi1>, vector<15x16x128xf32>
    %68 = vector.extract_strided_slice %46 {offsets = [2, 0], sizes = [1, 128], strides = [1, 1]} : vector<3x128xf32> to vector<1x128xf32>
    %69 = vector.shape_cast %68 : vector<1x128xf32> to vector<128xf32>
    %70 = vector.shape_cast %69 : vector<128xf32> to vector<1x1x128xf32>
    %71 = vector.broadcast %70 : vector<1x1x128xf32> to vector<15x16x128xf32>
    %72 = arith.mulf %67, %71 : vector<15x16x128xf32>
    %73 = arith.addf %62, %72 : vector<15x16x128xf32>
    %74 = arith.addf %43, %73 : vector<15x16x128xf32>
    %c1_20 = arith.constant 1 : index
    %c0_21 = arith.constant 0 : index
    %c0_22 = arith.constant 0 : index
    %75 = vector.load %arg9[%c1_20, %c0_21, %c0_22] : memref<16x16x128xf32, #tpu.memory_space<vmem>>, vector<15x16x128xf32>
    tpu.vector_store %arg9[%c1_20, %c0_21, %c0_22], %74 {strides = array<i32>} : memref<16x16x128xf32, #tpu.memory_space<vmem>>, vector<15x16x128xf32>,
    %c0_23 = arith.constant 0 : index
    %c0_24 = arith.constant 0 : index
    %c0_25 = arith.constant 0 : index
    %76 = vector.load %arg9[%c0_23, %c0_24, %c0_25] : memref<16x16x128xf32, #tpu.memory_space<vmem>>, vector<15x16x128xf32>
    %77 = vector.extract_strided_slice %9 {offsets = [1, 0, 0], sizes = [15, 16, 128], strides = [1, 1, 1]} : vector<16x16x128xf32> to vector<15x16x128xf32>
    %78 = vector.extract_strided_slice %0 {offsets = [2, 0, 0], sizes = [1, 3, 128], strides = [1, 1, 1]} : vector<3x3x128xf32> to vector<1x3x128xf32>
    %79 = vector.shape_cast %78 : vector<1x3x128xf32> to vector<3x128xf32>
    %80 = vector.extract_strided_slice %79 {offsets = [1, 0], sizes = [1, 128], strides = [1, 1]} : vector<3x128xf32> to vector<1x128xf32>
    %81 = vector.shape_cast %80 : vector<1x128xf32> to vector<128xf32>
    %82 = vector.shape_cast %81 : vector<128xf32> to vector<1x1x128xf32>
    %83 = vector.broadcast %82 : vector<1x1x128xf32> to vector<15x16x128xf32>
    %84 = arith.mulf %77, %83 : vector<15x16x128xf32>
    %c1_i32_26 = arith.constant 1 : i32
    %85 = tpu.dynamic_rotate %77 by %c1_i32_26 dim 1 : vector<15x16x128xf32>, i32 -> vector<15x16x128xf32>
    %cst_27 = arith.constant 0.000000e+00 : f32
    %86 = vector.shape_cast %5 : vector<1x16x1xi1> to vector<1x16x1xi1>
    %87 = vector.broadcast %86 : vector<1x16x1xi1> to vector<15x16x128xi1>
    %88 = vector.broadcast %cst_27 : f32 to vector<15x16x128xf32>
    %89 = arith.select %87, %85, %88 : vector<15x16x128xi1>, vector<15x16x128xf32>
    %90 = vector.extract_strided_slice %79 {offsets = [0, 0], sizes = [1, 128], strides = [1, 1]} : vector<3x128xf32> to vector<1x128xf32>
    %91 = vector.shape_cast %90 : vector<1x128xf32> to vector<128xf32>
    %92 = vector.shape_cast %91 : vector<128xf32> to vector<1x1x128xf32>
    %93 = vector.broadcast %92 : vector<1x1x128xf32> to vector<15x16x128xf32>
    %94 = arith.mulf %89, %93 : vector<15x16x128xf32>
    %95 = arith.addf %84, %94 : vector<15x16x128xf32>
    %c15_i32_28 = arith.constant 15 : i32
    %96 = tpu.dynamic_rotate %77 by %c15_i32_28 dim 1 : vector<15x16x128xf32>, i32 -> vector<15x16x128xf32>
    %cst_29 = arith.constant 0.000000e+00 : f32
    %97 = vector.shape_cast %7 : vector<1x16x1xi1> to vector<1x16x1xi1>
    %98 = vector.broadcast %97 : vector<1x16x1xi1> to vector<15x16x128xi1>
    %99 = vector.broadcast %cst_29 : f32 to vector<15x16x128xf32>
    %100 = arith.select %98, %96, %99 : vector<15x16x128xi1>, vector<15x16x128xf32>
    %101 = vector.extract_strided_slice %79 {offsets = [2, 0], sizes = [1, 128], strides = [1, 1]} : vector<3x128xf32> to vector<1x128xf32>
    %102 = vector.shape_cast %101 : vector<1x128xf32> to vector<128xf32>
    %103 = vector.shape_cast %102 : vector<128xf32> to vector<1x1x128xf32>
    %104 = vector.broadcast %103 : vector<1x1x128xf32> to vector<15x16x128xf32>
    %105 = arith.mulf %100, %104 : vector<15x16x128xf32>
    %106 = arith.addf %95, %105 : vector<15x16x128xf32>
    %107 = arith.addf %76, %106 : vector<15x16x128xf32>
    %c0_30 = arith.constant 0 : index
    %c0_31 = arith.constant 0 : index
    %c0_32 = arith.constant 0 : index
    %108 = vector.load %arg9[%c0_30, %c0_31, %c0_32] : memref<16x16x128xf32, #tpu.memory_space<vmem>>, vector<15x16x128xf32>
    tpu.vector_store %arg9[%c0_30, %c0_31, %c0_32], %107 {strides = array<i32>} : memref<16x16x128xf32, #tpu.memory_space<vmem>>, vector<15x16x128xf32>,
    %c0_33 = arith.constant 0 : index
    %c0_34 = arith.constant 0 : index
    %c0_35 = arith.constant 0 : index
    %109 = vector.load %arg9[%c0_33, %c0_34, %c0_35] : memref<16x16x128xf32, #tpu.memory_space<vmem>>, vector<1x16x128xf32>
    %c0_36 = arith.constant 0 : index
    %c0_37 = arith.constant 0 : index
    %c0_38 = arith.constant 0 : index
    %c0_39 = arith.constant 0 : index
    %110 = vector.load %arg4[%c0_36, %c0_37, %c0_38, %c0_39] : memref<1x1x16x128xf32, #tpu.memory_space<vmem>>, vector<1x1x16x128xf32>
    %111 = vector.shape_cast %110 : vector<1x1x16x128xf32> to vector<1x16x128xf32>
    %112 = vector.extract_strided_slice %0 {offsets = [0, 0, 0], sizes = [1, 3, 128], strides = [1, 1, 1]} : vector<3x3x128xf32> to vector<1x3x128xf32>
    %113 = vector.shape_cast %112 : vector<1x3x128xf32> to vector<3x128xf32>
    %114 = vector.extract_strided_slice %113 {offsets = [1, 0], sizes = [1, 128], strides = [1, 1]} : vector<3x128xf32> to vector<1x128xf32>
    %115 = vector.shape_cast %114 : vector<1x128xf32> to vector<128xf32>
    %116 = vector.shape_cast %115 : vector<128xf32> to vector<1x1x128xf32>
    %117 = vector.broadcast %116 : vector<1x1x128xf32> to vector<1x16x128xf32>
    %118 = arith.mulf %111, %117 : vector<1x16x128xf32>
    %c1_i32_40 = arith.constant 1 : i32
    %119 = tpu.dynamic_rotate %111 by %c1_i32_40 dim 1 : vector<1x16x128xf32>, i32 -> vector<1x16x128xf32>
    %cst_41 = arith.constant 0.000000e+00 : f32
    %120 = vector.shape_cast %5 : vector<1x16x1xi1> to vector<1x16x1xi1>
    %121 = vector.broadcast %120 : vector<1x16x1xi1> to vector<1x16x128xi1>
    %122 = vector.broadcast %cst_41 : f32 to vector<1x16x128xf32>
    %123 = arith.select %121, %119, %122 : vector<1x16x128xi1>, vector<1x16x128xf32>
    %124 = vector.extract_strided_slice %113 {offsets = [0, 0], sizes = [1, 128], strides = [1, 1]} : vector<3x128xf32> to vector<1x128xf32>
    %125 = vector.shape_cast %124 : vector<1x128xf32> to vector<128xf32>
    %126 = vector.shape_cast %125 : vector<128xf32> to vector<1x1x128xf32>
    %127 = vector.broadcast %126 : vector<1x1x128xf32> to vector<1x16x128xf32>
    %128 = arith.mulf %123, %127 : vector<1x16x128xf32>
    %129 = arith.addf %118, %128 : vector<1x16x128xf32>
    %c15_i32_42 = arith.constant 15 : i32
    %130 = tpu.dynamic_rotate %111 by %c15_i32_42 dim 1 : vector<1x16x128xf32>, i32 -> vector<1x16x128xf32>
    %cst_43 = arith.constant 0.000000e+00 : f32
    %131 = vector.shape_cast %7 : vector<1x16x1xi1> to vector<1x16x1xi1>
    %132 = vector.broadcast %131 : vector<1x16x1xi1> to vector<1x16x128xi1>
    %133 = vector.broadcast %cst_43 : f32 to vector<1x16x128xf32>
    %134 = arith.select %132, %130, %133 : vector<1x16x128xi1>, vector<1x16x128xf32>
    %135 = vector.extract_strided_slice %113 {offsets = [2, 0], sizes = [1, 128], strides = [1, 1]} : vector<3x128xf32> to vector<1x128xf32>
    %136 = vector.shape_cast %135 : vector<1x128xf32> to vector<128xf32>
    %137 = vector.shape_cast %136 : vector<128xf32> to vector<1x1x128xf32>
    %138 = vector.broadcast %137 : vector<1x1x128xf32> to vector<1x16x128xf32>
    %139 = arith.mulf %134, %138 : vector<1x16x128xf32>
    %140 = arith.addf %129, %139 : vector<1x16x128xf32>
    %141 = arith.addf %109, %140 : vector<1x16x128xf32>
    %c0_44 = arith.constant 0 : index
    %c0_45 = arith.constant 0 : index
    %c0_46 = arith.constant 0 : index
    %142 = vector.load %arg9[%c0_44, %c0_45, %c0_46] : memref<16x16x128xf32, #tpu.memory_space<vmem>>, vector<1x16x128xf32>
    tpu.vector_store %arg9[%c0_44, %c0_45, %c0_46], %141 {strides = array<i32>} : memref<16x16x128xf32, #tpu.memory_space<vmem>>, vector<1x16x128xf32>,
    %c15 = arith.constant 15 : index
    %c0_47 = arith.constant 0 : index
    %c0_48 = arith.constant 0 : index
    %143 = vector.load %arg9[%c15, %c0_47, %c0_48] : memref<16x16x128xf32, #tpu.memory_space<vmem>>, vector<1x16x128xf32>
    %c0_49 = arith.constant 0 : index
    %c0_50 = arith.constant 0 : index
    %c0_51 = arith.constant 0 : index
    %c0_52 = arith.constant 0 : index
    %144 = vector.load %arg5[%c0_49, %c0_50, %c0_51, %c0_52] : memref<1x1x16x128xf32, #tpu.memory_space<vmem>>, vector<1x1x16x128xf32>
    %145 = vector.shape_cast %144 : vector<1x1x16x128xf32> to vector<1x16x128xf32>
    %146 = vector.extract_strided_slice %0 {offsets = [2, 0, 0], sizes = [1, 3, 128], strides = [1, 1, 1]} : vector<3x3x128xf32> to vector<1x3x128xf32>
    %147 = vector.shape_cast %146 : vector<1x3x128xf32> to vector<3x128xf32>
    %148 = vector.extract_strided_slice %147 {offsets = [1, 0], sizes = [1, 128], strides = [1, 1]} : vector<3x128xf32> to vector<1x128xf32>
    %149 = vector.shape_cast %148 : vector<1x128xf32> to vector<128xf32>
    %150 = vector.shape_cast %149 : vector<128xf32> to vector<1x1x128xf32>
    %151 = vector.broadcast %150 : vector<1x1x128xf32> to vector<1x16x128xf32>
    %152 = arith.mulf %145, %151 : vector<1x16x128xf32>
    %c1_i32_53 = arith.constant 1 : i32
    %153 = tpu.dynamic_rotate %145 by %c1_i32_53 dim 1 : vector<1x16x128xf32>, i32 -> vector<1x16x128xf32>
    %cst_54 = arith.constant 0.000000e+00 : f32
    %154 = vector.shape_cast %5 : vector<1x16x1xi1> to vector<1x16x1xi1>
    %155 = vector.broadcast %154 : vector<1x16x1xi1> to vector<1x16x128xi1>
    %156 = vector.broadcast %cst_54 : f32 to vector<1x16x128xf32>
    %157 = arith.select %155, %153, %156 : vector<1x16x128xi1>, vector<1x16x128xf32>
    %158 = vector.extract_strided_slice %147 {offsets = [0, 0], sizes = [1, 128], strides = [1, 1]} : vector<3x128xf32> to vector<1x128xf32>
    %159 = vector.shape_cast %158 : vector<1x128xf32> to vector<128xf32>
    %160 = vector.shape_cast %159 : vector<128xf32> to vector<1x1x128xf32>
    %161 = vector.broadcast %160 : vector<1x1x128xf32> to vector<1x16x128xf32>
    %162 = arith.mulf %157, %161 : vector<1x16x128xf32>
    %163 = arith.addf %152, %162 : vector<1x16x128xf32>
    %c15_i32_55 = arith.constant 15 : i32
    %164 = tpu.dynamic_rotate %145 by %c15_i32_55 dim 1 : vector<1x16x128xf32>, i32 -> vector<1x16x128xf32>
    %cst_56 = arith.constant 0.000000e+00 : f32
    %165 = vector.shape_cast %7 : vector<1x16x1xi1> to vector<1x16x1xi1>
    %166 = vector.broadcast %165 : vector<1x16x1xi1> to vector<1x16x128xi1>
    %167 = vector.broadcast %cst_56 : f32 to vector<1x16x128xf32>
    %168 = arith.select %166, %164, %167 : vector<1x16x128xi1>, vector<1x16x128xf32>
    %169 = vector.extract_strided_slice %147 {offsets = [2, 0], sizes = [1, 128], strides = [1, 1]} : vector<3x128xf32> to vector<1x128xf32>
    %170 = vector.shape_cast %169 : vector<1x128xf32> to vector<128xf32>
    %171 = vector.shape_cast %170 : vector<128xf32> to vector<1x1x128xf32>
    %172 = vector.broadcast %171 : vector<1x1x128xf32> to vector<1x16x128xf32>
    %173 = arith.mulf %168, %172 : vector<1x16x128xf32>
    %174 = arith.addf %163, %173 : vector<1x16x128xf32>
    %175 = arith.addf %143, %174 : vector<1x16x128xf32>
    %c15_57 = arith.constant 15 : index
    %c0_58 = arith.constant 0 : index
    %c0_59 = arith.constant 0 : index
    %176 = vector.load %arg9[%c15_57, %c0_58, %c0_59] : memref<16x16x128xf32, #tpu.memory_space<vmem>>, vector<1x16x128xf32>
    tpu.vector_store %arg9[%c15_57, %c0_58, %c0_59], %175 {strides = array<i32>} : memref<16x16x128xf32, #tpu.memory_space<vmem>>, vector<1x16x128xf32>,
    %c0_60 = arith.constant 0 : index
    %c0_61 = arith.constant 0 : index
    %c0_62 = arith.constant 0 : index
    %177 = vector.load %arg9[%c0_60, %c0_61, %c0_62] : memref<16x16x128xf32, #tpu.memory_space<vmem>>, vector<16x16x128xf32>
    %c0_63 = arith.constant 0 : index
    %c0_64 = arith.constant 0 : index
    %c0_65 = arith.constant 0 : index
    %c0_66 = arith.constant 0 : index
    %178 = vector.load %arg8[%c0_63, %c0_64, %c0_65, %c0_66] : memref<1x16x16x128xf32, #tpu.memory_space<vmem>>, vector<1x16x16x128xf32>
    %179 = vector.shape_cast %178 : vector<1x16x16x128xf32> to vector<16x16x128xf32>
    %180 = vector.shape_cast %177 : vector<16x16x128xf32> to vector<1x16x16x128xf32>
    tpu.vector_store %arg8[%c0_63, %c0_64, %c0_65, %c0_66], %180 {strides = array<i32>} : memref<1x16x16x128xf32, #tpu.memory_space<vmem>>, vector<1x16x16x128xf32>,
    return
  }
  func.func @transform_0(%arg0: i32, %arg1: i32, %arg2: i32) -> (i32, i32, i32, i32) {
    %c0_i32 = arith.constant 0 : i32
    %c0_i32_0 = arith.constant 0 : i32
    return %arg1, %arg2, %c0_i32, %arg0 : i32, i32, i32, i32
  }
  func.func @transform_1(%arg0: i32, %arg1: i32, %arg2: i32) -> (i32, i32, i32, i32) {
    %c0_i32 = arith.constant 0 : i32
    %c0_i32_0 = arith.constant 0 : i32
    return %arg1, %arg2, %c0_i32, %arg0 : i32, i32, i32, i32
  }
  func.func @transform_2(%arg0: i32, %arg1: i32, %arg2: i32) -> (i32, i32, i32, i32) {
    %c0_i32 = arith.constant 0 : i32
    %c0_i32_0 = arith.constant 0 : i32
    return %arg1, %arg2, %c0_i32, %arg0 : i32, i32, i32, i32
  }
  func.func @transform_3(%arg0: i32, %arg1: i32, %arg2: i32) -> (i32, i32, i32) {
    %c0_i32 = arith.constant 0 : i32
    %c0_i32_0 = arith.constant 0 : i32
    %c0_i32_1 = arith.constant 0 : i32
    return %c0_i32, %c0_i32_0, %arg0 : i32, i32, i32
  }
  func.func @transform_4(%arg0: i32, %arg1: i32, %arg2: i32) -> (i32, i32, i32) {
    %c0_i32 = arith.constant 0 : i32
    %c0_i32_0 = arith.constant 0 : i32
    %c0_i32_1 = arith.constant 0 : i32
    return %c0_i32, %c0_i32_0, %arg0 : i32, i32, i32
  }
  func.func @transform_5(%arg0: i32, %arg1: i32, %arg2: i32) -> (i32, i32, i32, i32) {
    %c0_i32 = arith.constant 0 : i32
    %c0_i32_0 = arith.constant 0 : i32
    return %arg1, %arg2, %c0_i32, %arg0 : i32, i32, i32, i32
  }
}

</mosaic_0001>

<llo_original>
// kernel: tpu_custom_call.1
$region0: #{tpu_custom_call.1}
  #allocation0 [shape = 'u32[]', space=smem, size = 0x4, offset = 0x4, fixed_abs, tag = 'smem constant byte address 0x4 - core index']
  #allocation1 [shape = 'u32[72,128]{1,0:T(1,128)}', space=vmem, size = 0x9000, scoped, tag = 'internal scratch']
  #allocation2 [shape = 'f32[16,16,128]{2,1,0:T(8,128)}', space=vmem, size = 0x20000, scoped, tag = 'scratch operand']
  %s0 = inlined_call_operand.hbm [shape: f32[2,16,16,128], index: 0, kind: input, shape index: {}]
  %s1 = inlined_call_operand.hbm [shape: f32[2,1,16,128], index: 1, kind: input, shape index: {}]
  %s2 = inlined_call_operand.hbm [shape: f32[2,1,16,128], index: 2, kind: input, shape index: {}]
  %s3 = inlined_call_operand.hbm [shape: f32[3,3,128], index: 3, kind: input, shape index: {}]
  %s4 = inlined_call_operand.vmem [shape: f32[1,1,128], index: 4, kind: input, shape index: {}]
  %s5 = inlined_call_operand.hbm [shape: f32[2,16,16,128], index: 5, kind: output, shape index: {}]
  %s6 = sld [smem:[#allocation0]]
  $region69: #{tpu_custom_call.1} parent=0
    _
  %s8 = ssub.s32 1, %s6
  %s9 = scalar_select 0, %s8, %s6
  $region1: #{tpu_custom_call.1} parent=0
    #allocation3 [shape = 'u8[262144]{0}', space=vmem, size = 0x40000, scoped, tag = 'input window, operand 0']
    #allocation4 [shape = 's32[2]{0}', space=sflag, size = 0x8, scoped, tag = 'scoped memory for tpu_custom_call.1']
    #allocation5 [shape = 's32[2]{0}', space=sflag, size = 0x8, scoped, tag = 'scoped memory for tpu_custom_call.1']
    #allocation6 [shape = 'u8[16384]{0}', space=vmem, size = 0x4000, scoped, tag = 'input window, operand 1']
    #allocation7 [shape = 's32[2]{0}', space=sflag, size = 0x8, scoped, tag = 'scoped memory for tpu_custom_call.1']
    #allocation8 [shape = 'u8[16384]{0}', space=vmem, size = 0x4000, scoped, tag = 'input window, operand 2']
    #allocation9 [shape = 'u8[6144]{0}', space=vmem, size = 0x1800, scoped, tag = 'input window, operand 3, single buffered']
    #allocation10 [shape = 's32[1]{0}', space=sflag, size = 0x4, scoped, tag = 'scoped memory for tpu_custom_call.1']
    #allocation11 [shape = 'u8[262144]{0}', space=vmem, size = 0x40000, scoped, tag = 'output window, operand 0']
    %10 = vsyncpa [#allocation4], 0
    %s11 = scalar_lea.sflag [#allocation4], 1
    %12 = vsyncpa %s11, 0
    %13 = vsyncpa [#allocation7], 0
    %s14 = scalar_lea.sflag [#allocation7], 1
    %15 = vsyncpa %s14, 0
    %16 = vsyncpa [#allocation10], 0
    %17 = vsyncpa [#allocation5], 0
    %s18 = scalar_lea.sflag [#allocation5], 1
    %19 = vsyncpa %s18, 0
    loop: start=0, step=1, limit=4
    $region2: #{tpu_custom_call.1} parent=1 // loop_pre_header
      _
    $region3: #{tpu_custom_call.1} parent=1 // loop_header
      %s21 = sphi 0, %s25
      %p22 = scmp.ge.s32.totalorder %s21, 4
      %s28 = sphi 0, %s47
      %s29 = sphi 0, %s43
      %s30 = sphi 0, %s39
      %s31 = sphi 0, %s28
      %s32 = sphi 0, %s29
      %s33 = sphi 0, %s30
      %s34 = sphi 0, %s31
      %s35 = sphi 0, %s32
      %s36 = sphi 0, %s33
      %s54 = sphi 0, %s56
      %s57 = sphi 0, %s54
      %s58 = sphi 0, %s57
      %s74 = sphi 0, %s58
      %s84 = sphi 0, %s86
      %s87 = sphi 0, %s84
      %s88 = sphi 0, %s87
      %s104 = sphi 0, %s88
      %s114 = sphi 0, %s116
      %s117 = sphi 0, %s114
      %s118 = sphi 0, %s117
      %s134 = sphi 0, %s118
      %s140 = sphi 0, %s142
      %s143 = sphi 0, %s140
      %s144 = sphi 0, %s143
      %s160 = sphi 0, %s144
      %s166 = sphi 0, %s168
      %s169 = sphi 0, %s166
      %s170 = sphi 0, %s169
      %s186 = sphi 0, %s170
      %s196 = sphi 0, %s198
      %s199 = sphi 0, %s196
      %s200 = sphi 0, %s199
      %s216 = sphi 0, %s200
    $region4: #{tpu_custom_call.1} parent=1 // loop_header_branch
      %24 = sbr.rel (%p22) target = $region8
    $region5: #{tpu_custom_call.1} parent=1 // loop_body
      %s26 = ssub.s32 %s21, 1
      %s27 = ssub.s32 %s21, 2
      %s37 = sadd.s32 1, %s30
      %p38 = scmp.ge.s32.totalorder %s37, 1
      %s39 = scalar_select %p38, 0, %s37
      %s40 = sadd.s32 1, %s29
      %s41 = scalar_select %p38, %s40, %s29
      %p42 = scmp.ge.s32.totalorder %s41, 2
      %s43 = scalar_select %p42, 0, %s41
      %s44 = sadd.s32 1, %s28
      %s45 = scalar_select %p42, %s44, %s28
      %p46 = scmp.ge.s32.totalorder %s45, 1
      %s47 = scalar_select %p46, 0, %s45
      %s48 = ssub.s32 %s29, %s43
      %s49 = ssub.s32 %s30, %s39
      %s50 = sor.u32 %s48, %s49
      %s51 = ssub.s32 %s28, %s47
      %s52 = sor.u32 %s50, %s51
      %p53 = scmp.eq.s32.totalorder %s52, 0
      %s55 = sadd.s32 %s54, 1
      %s56 = scalar_select %p53, %s54, %s55
      %p59 = pneg %p53
      %p60 = scmp.eq.s32.totalorder %s21, 1
      %p61 = por %p59, %p60
      %p62 = scmp.ne.s32.totalorder %s54, %s57
      %p63 = scmp.eq.s32.totalorder %s21, 0
      %p64 = por %p62, %p63
      %p65 = scmp.ne.s32.totalorder %s54, %s57
      %p66 = scmp.eq.s32.totalorder %s26, 1
      %p67 = por %p65, %p66
      %p68 = scmp.ne.s32.totalorder %s57, %s58
      %p69 = scmp.eq.s32.totalorder %s26, 0
      %p70 = por %p68, %p69
      %p71 = scmp.ne.s32.totalorder %s57, %s58
      %p72 = scmp.eq.s32.totalorder %s27, 1
      %p73 = por %p71, %p72
      %p75 = scmp.ne.s32.totalorder %s58, %s74
      %p76 = scmp.eq.s32.totalorder %s27, 0
      %p77 = por %p75, %p76
      %s78 = ssub.s32 %s29, %s43
      %s79 = ssub.s32 %s30, %s39
      %s80 = sor.u32 %s78, %s79
      %s81 = ssub.s32 %s28, %s47
      %s82 = sor.u32 %s80, %s81
      %p83 = scmp.eq.s32.totalorder %s82, 0
      %s85 = sadd.s32 %s84, 1
      %s86 = scalar_select %p83, %s84, %s85
      %p89 = pneg %p83
      %p90 = scmp.eq.s32.totalorder %s21, 1
      %p91 = por %p89, %p90
      %p92 = scmp.ne.s32.totalorder %s84, %s87
      %p93 = scmp.eq.s32.totalorder %s21, 0
      %p94 = por %p92, %p93
      %p95 = scmp.ne.s32.totalorder %s84, %s87
      %p96 = scmp.eq.s32.totalorder %s26, 1
      %p97 = por %p95, %p96
      %p98 = scmp.ne.s32.totalorder %s87, %s88
      %p99 = scmp.eq.s32.totalorder %s26, 0
      %p100 = por %p98, %p99
      %p101 = scmp.ne.s32.totalorder %s87, %s88
      %p102 = scmp.eq.s32.totalorder %s27, 1
      %p103 = por %p101, %p102
      %p105 = scmp.ne.s32.totalorder %s88, %s104
      %p106 = scmp.eq.s32.totalorder %s27, 0
      %p107 = por %p105, %p106
      %s108 = ssub.s32 %s29, %s43
      %s109 = ssub.s32 %s30, %s39
      %s110 = sor.u32 %s108, %s109
      %s111 = ssub.s32 %s28, %s47
      %s112 = sor.u32 %s110, %s111
      %p113 = scmp.eq.s32.totalorder %s112, 0
      %s115 = sadd.s32 %s114, 1
      %s116 = scalar_select %p113, %s114, %s115
      %p119 = pneg %p113
      %p120 = scmp.eq.s32.totalorder %s21, 1
      %p121 = por %p119, %p120
      %p122 = scmp.ne.s32.totalorder %s114, %s117
      %p123 = scmp.eq.s32.totalorder %s21, 0
      %p124 = por %p122, %p123
      %p125 = scmp.ne.s32.totalorder %s114, %s117
      %p126 = scmp.eq.s32.totalorder %s26, 1
      %p127 = por %p125, %p126
      %p128 = scmp.ne.s32.totalorder %s117, %s118
      %p129 = scmp.eq.s32.totalorder %s26, 0
      %p130 = por %p128, %p129
      %p131 = scmp.ne.s32.totalorder %s117, %s118
      %p132 = scmp.eq.s32.totalorder %s27, 1
      %p133 = por %p131, %p132
      %p135 = scmp.ne.s32.totalorder %s118, %s134
      %p136 = scmp.eq.s32.totalorder %s27, 0
      %p137 = por %p135, %p136
      %s138 = ssub.s32 %s28, %s47
      %p139 = scmp.eq.s32.totalorder %s138, 0
      %s141 = sadd.s32 %s140, 1
      %s142 = scalar_select %p139, %s140, %s141
      %p145 = pneg %p139
      %p146 = scmp.eq.s32.totalorder %s21, 1
      %p147 = por %p145, %p146
      %p148 = scmp.ne.s32.totalorder %s140, %s143
      %p149 = scmp.eq.s32.totalorder %s21, 0
      %p150 = por %p148, %p149
      %p151 = scmp.ne.s32.totalorder %s140, %s143
      %p152 = scmp.eq.s32.totalorder %s26, 1
      %p153 = por %p151, %p152
      %p154 = scmp.ne.s32.totalorder %s143, %s144
      %p155 = scmp.eq.s32.totalorder %s26, 0
      %p156 = por %p154, %p155
      %p157 = scmp.ne.s32.totalorder %s143, %s144
      %p158 = scmp.eq.s32.totalorder %s27, 1
      %p159 = por %p157, %p158
      %p161 = scmp.ne.s32.totalorder %s144, %s160
      %p162 = scmp.eq.s32.totalorder %s27, 0
      %p163 = por %p161, %p162
      %s164 = ssub.s32 %s28, %s47
      %p165 = scmp.eq.s32.totalorder %s164, 0
      %s167 = sadd.s32 %s166, 1
      %s168 = scalar_select %p165, %s166, %s167
      %p171 = pneg %p165
      %p172 = scmp.eq.s32.totalorder %s21, 1
      %p173 = por %p171, %p172
      %p174 = scmp.ne.s32.totalorder %s166, %s169
      %p175 = scmp.eq.s32.totalorder %s21, 0
      %p176 = por %p174, %p175
      %p177 = scmp.ne.s32.totalorder %s166, %s169
      %p178 = scmp.eq.s32.totalorder %s26, 1
      %p179 = por %p177, %p178
      %p180 = scmp.ne.s32.totalorder %s169, %s170
      %p181 = scmp.eq.s32.totalorder %s26, 0
      %p182 = por %p180, %p181
      %p183 = scmp.ne.s32.totalorder %s169, %s170
      %p184 = scmp.eq.s32.totalorder %s27, 1
      %p185 = por %p183, %p184
      %p187 = scmp.ne.s32.totalorder %s170, %s186
      %p188 = scmp.eq.s32.totalorder %s27, 0
      %p189 = por %p187, %p188
      %s190 = ssub.s32 %s29, %s43
      %s191 = ssub.s32 %s30, %s39
      %s192 = sor.u32 %s190, %s191
      %s193 = ssub.s32 %s28, %s47
      %s194 = sor.u32 %s192, %s193
      %p195 = scmp.eq.s32.totalorder %s194, 0
      %s197 = sadd.s32 %s196, 1
      %s198 = scalar_select %p195, %s196, %s197
      %p201 = pneg %p195
      %p202 = scmp.eq.s32.totalorder %s21, 1
      %p203 = por %p201, %p202
      %p204 = scmp.ne.s32.totalorder %s196, %s199
      %p205 = scmp.eq.s32.totalorder %s21, 0
      %p206 = por %p204, %p205
      %p207 = scmp.ne.s32.totalorder %s196, %s199
      %p208 = scmp.eq.s32.totalorder %s26, 1
      %p209 = por %p207, %p208
      %p210 = scmp.ne.s32.totalorder %s199, %s200
      %p211 = scmp.eq.s32.totalorder %s26, 0
      %p212 = por %p210, %p211
      %p213 = scmp.ne.s32.totalorder %s199, %s200
      %p214 = scmp.eq.s32.totalorder %s27, 1
      %p215 = por %p213, %p214
      %p217 = scmp.ne.s32.totalorder %s200, %s216
      %p218 = scmp.eq.s32.totalorder %s27, 0
      %p219 = por %p217, %p218
      %p220 = scmp.le.s32.totalorder 1, %s21
      %p221 = scmp.lt.s32.totalorder %s21, 3
      %p222 = pnand %p220, %p221
      %p223 = pneg %p222
      // Predicated region
      $region9: #{tpu_custom_call.1} parent=5 // pred_check
        _
      $region10: #{tpu_custom_call.1} parent=5 // pred_check_branch
        %225 = sbr.rel (%p222) target = $region12
      $region11: #{tpu_custom_call.1} parent=5 // pred_region
        %s226 = ssub.s32 %s21, 1
        // Predicated region
        $region13: #{tpu_custom_call.1} parent=11 // pred_check
          %p227 = pneg %p156
        $region14: #{tpu_custom_call.1} parent=11 // pred_check_branch
          %229 = sbr.rel (%p227) target = $region16
        $region15: #{tpu_custom_call.1} parent=11 // pred_region
          %231 = vsyncadd [#allocation10], 0
          %s232 = smul.addr %s31, 4
          %s233 = scalar_lea.hbm %s3, %s232
          %s234 = sshll.u32 %s233, 4
          %s235 = int_to_ptr.hbm [resolvable:$true] %s234
          %s236 = sshll.u32 [#allocation9], 4
          %s237 = int_to_ptr.vmem [resolvable:$true] %s236
          %242 = dma.hbm_to_vmem [thread:$0]  %s235, 192, %s237, [#allocation10], 64, 64, 4
        $region16: #{tpu_custom_call.1} parent=11 // pred_fallthru
          _
        // Predicated region
        $region17: #{tpu_custom_call.1} parent=11 // pred_check
          %p243 = pneg %p182
        $region18: #{tpu_custom_call.1} parent=11 // pred_check_branch
          %245 = sbr.rel (%p243) target = $region20
        $region19: #{tpu_custom_call.1} parent=11 // pred_region
          %p246 = scmp.lt.s32.totalorder %s31, 0
          %s247 = scalar_select %p246, %s31, 0
          %s248 = scalar_lea.vmem %s4, %s247
        $region20: #{tpu_custom_call.1} parent=11 // pred_fallthru
          _
      $region12: #{tpu_custom_call.1} parent=5 // pred_fallthru
        _
      %p249 = scmp.lt.s32.totalorder %s21, 2
      // Predicated region
      $region21: #{tpu_custom_call.1} parent=5 // pred_check
        %p250 = pneg %p249
      $region22: #{tpu_custom_call.1} parent=5 // pred_check_branch
        %252 = sbr.rel (%p250) target = $region24
      $region23: #{tpu_custom_call.1} parent=5 // pred_region
        // Predicated region
        $region25: #{tpu_custom_call.1} parent=23 // pred_check
          %p253 = pneg %p64
        $region26: #{tpu_custom_call.1} parent=23 // pred_check_branch
          %255 = sbr.rel (%p253) target = $region28
        $region27: #{tpu_custom_call.1} parent=23 // pred_region
          %s256 = sand.u32 %s54, 1
          %s257 = scalar_lea.sflag [#allocation4], %s256
          %s258 = sand.u32 %s54, 1
          %s259 = smul.addr %s258, 256
          %s260 = scalar_lea.vmem [#allocation3], %s259
          %s261 = smul.u32 16, %s30
          %263 = vsyncadd %s257, 0
          %s264 = smul.addr %s261, 2
          %s265 = sadd.s32 %s28, %s264
          %s266 = smul.addr %s29, 32
          %s267 = sadd.s32 %s265, %s266
          %s268 = smul.addr %s267, 8
          %s269 = scalar_lea.hbm %s0, %s268
          %s270 = sshll.u32 %s269, 4
          %s271 = int_to_ptr.hbm [resolvable:$true] %s270
          %s272 = sshll.u32 %s260, 4
          %s273 = int_to_ptr.vmem [resolvable:$true] %s272
          %278 = dma.hbm_to_vmem [thread:$0]  %s271, 4096, %s273, %s257, 128, 128, 8
        $region28: #{tpu_custom_call.1} parent=23 // pred_fallthru
          _
        // Predicated region
        $region29: #{tpu_custom_call.1} parent=23 // pred_check
          %p279 = pneg %p94
        $region30: #{tpu_custom_call.1} parent=23 // pred_check_branch
          %281 = sbr.rel (%p279) target = $region32
        $region31: #{tpu_custom_call.1} parent=23 // pred_region
          %s282 = sand.u32 %s21, 1
          %s283 = scalar_lea.sflag [#allocation7], %s282
          %s284 = sand.u32 %s84, 1
          %s285 = smul.addr %s284, 16
          %s286 = scalar_lea.vmem [#allocation6], %s285
          %288 = vsyncadd %s283, 0
          %s289 = smul.addr %s30, 2
          %s290 = sadd.s32 %s28, %s289
          %s291 = smul.addr %s29, 2
          %s292 = sadd.s32 %s290, %s291
          %s293 = smul.addr %s292, 8
          %s294 = scalar_lea.hbm %s1, %s293
          %s295 = sshll.u32 %s294, 4
          %s296 = int_to_ptr.hbm [resolvable:$true] %s295
          %s297 = sshll.u32 %s286, 4
          %s298 = int_to_ptr.vmem [resolvable:$true] %s297
          %303 = dma.hbm_to_vmem [thread:$0]  %s296, 256, %s298, %s283, 128, 128, 8
        $region32: #{tpu_custom_call.1} parent=23 // pred_fallthru
          _
        // Predicated region
        $region33: #{tpu_custom_call.1} parent=23 // pred_check
          %p304 = pneg %p124
        $region34: #{tpu_custom_call.1} parent=23 // pred_check_branch
          %306 = sbr.rel (%p304) target = $region36
        $region35: #{tpu_custom_call.1} parent=23 // pred_region
          %s307 = sand.u32 %s21, 1
          %s308 = scalar_lea.sflag [#allocation7], %s307
          %s309 = sand.u32 %s114, 1
          %s310 = smul.addr %s309, 16
          %s311 = scalar_lea.vmem [#allocation8], %s310
          %313 = vsyncadd %s308, 0
          %s314 = smul.addr %s30, 2
          %s315 = sadd.s32 %s28, %s314
          %s316 = smul.addr %s29, 2
          %s317 = sadd.s32 %s315, %s316
          %s318 = smul.addr %s317, 8
          %s319 = scalar_lea.hbm %s2, %s318
          %s320 = sshll.u32 %s319, 4
          %s321 = int_to_ptr.hbm [resolvable:$true] %s320
          %s322 = sshll.u32 %s311, 4
          %s323 = int_to_ptr.vmem [resolvable:$true] %s322
          %328 = dma.hbm_to_vmem [thread:$0]  %s321, 256, %s323, %s308, 128, 128, 8
        $region36: #{tpu_custom_call.1} parent=23 // pred_fallthru
          _
      $region24: #{tpu_custom_call.1} parent=5 // pred_fallthru
        _
      %p329 = scmp.le.s32.totalorder 1, %s21
      %p330 = scmp.lt.s32.totalorder %s21, 3
      %p331 = pnand %p329, %p330
      %p332 = pneg %p331
      // Predicated region
      $region37: #{tpu_custom_call.1} parent=5 // pred_check
        _
      $region38: #{tpu_custom_call.1} parent=5 // pred_check_branch
        %334 = sbr.rel (%p331) target = $region40
      $region39: #{tpu_custom_call.1} parent=5 // pred_region
        %s335 = ssub.s32 %s21, 1
        %s336 = sand.u32 %s57, 1
        %s337 = scalar_lea.sflag [#allocation4], %s336
        %s338 = sand.u32 %s57, 1
        %s339 = smul.addr %s338, 256
        %s340 = scalar_lea.vmem [#allocation3], %s339
        // Predicated region
        $region41: #{tpu_custom_call.1} parent=39 // pred_check
          %p341 = pneg %p70
        $region42: #{tpu_custom_call.1} parent=39 // pred_check_branch
          %343 = sbr.rel (%p341) target = $region44
        $region43: #{tpu_custom_call.1} parent=39 // pred_region
          %345 = dma.done %s337, 4096
        $region44: #{tpu_custom_call.1} parent=39 // pred_fallthru
          _
        %s346 = sand.u32 %s26, 1
        %s347 = scalar_lea.sflag [#allocation7], %s346
        %s348 = sand.u32 %s87, 1
        %s349 = smul.addr %s348, 16
        %s350 = scalar_lea.vmem [#allocation6], %s349
        // Predicated region
        $region45: #{tpu_custom_call.1} parent=39 // pred_check
          %p351 = pneg %p100
        $region46: #{tpu_custom_call.1} parent=39 // pred_check_branch
          %353 = sbr.rel (%p351) target = $region48
        $region47: #{tpu_custom_call.1} parent=39 // pred_region
          %355 = dma.done %s347, 256
        $region48: #{tpu_custom_call.1} parent=39 // pred_fallthru
          _
        %s356 = sand.u32 %s26, 1
        %s357 = scalar_lea.sflag [#allocation7], %s356
        %s358 = sand.u32 %s117, 1
        %s359 = smul.addr %s358, 16
        %s360 = scalar_lea.vmem [#allocation8], %s359
        // Predicated region
        $region49: #{tpu_custom_call.1} parent=39 // pred_check
          %p361 = pneg %p130
        $region50: #{tpu_custom_call.1} parent=39 // pred_check_branch
          %363 = sbr.rel (%p361) target = $region52
        $region51: #{tpu_custom_call.1} parent=39 // pred_region
          %365 = dma.done %s357, 256
        $region52: #{tpu_custom_call.1} parent=39 // pred_fallthru
          _
        // Predicated region
        $region53: #{tpu_custom_call.1} parent=39 // pred_check
          %p366 = pneg %p156
        $region54: #{tpu_custom_call.1} parent=39 // pred_check_branch
          %368 = sbr.rel (%p366) target = $region56
        $region55: #{tpu_custom_call.1} parent=39 // pred_region
          %370 = dma.done [#allocation10], 192
        $region56: #{tpu_custom_call.1} parent=39 // pred_fallthru
          _
        %s371 = sand.u32 %s57, 1
        %s372 = scalar_lea.sflag [#allocation4], %s371
        %s373 = sand.u32 %s57, 1
        %s374 = smul.addr %s373, 256
        %s375 = scalar_lea.vmem [#allocation3], %s374
        %p376 = pneg %p70
        %p377 = pneg %p67
        %s378 = sand.u32 %s26, 1
        %s379 = scalar_lea.sflag [#allocation7], %s378
        %s380 = sand.u32 %s87, 1
        %s381 = smul.addr %s380, 16
        %s382 = scalar_lea.vmem [#allocation6], %s381
        %p383 = pneg %p100
        %p384 = pneg %p97
        %s385 = sand.u32 %s26, 1
        %s386 = scalar_lea.sflag [#allocation7], %s385
        %s387 = sand.u32 %s117, 1
        %s388 = smul.addr %s387, 16
        %s389 = scalar_lea.vmem [#allocation8], %s388
        %p390 = pneg %p130
        %p391 = pneg %p127
        %p392 = pneg %p156
        %p393 = pneg %p153
        %p394 = scmp.lt.s32.totalorder %s31, 0
        %s395 = scalar_select %p394, %s31, 0
        %s396 = scalar_lea.vmem %s4, %s395
        %p397 = pneg %p182
        %p398 = pneg %p179
        %p399 = pneg %p212
        %p400 = pneg %p209
        %s401 = sand.u32 %s199, 1
        %s402 = scalar_lea.sflag [#allocation5], %s401
        %s403 = sand.u32 %s199, 1
        %s404 = smul.addr %s403, 256
        %s405 = scalar_lea.vmem [#allocation11], %s404
        %s406 = smul.u32 16, %s33
        %p407 = scmp.lt.s32.totalorder %s31, 0
        %s408 = scalar_select %p407, %s31, 0
        %s409 = scalar_lea.vmem %s4, %s408
        %s410 = smul.u32 16, %s33
        %v411 = vld [vmem:[#allocation9] sm:$0x7]
        %v412 = vld [vmem:[#allocation9 + $0x4] sm:$0x7]
        %v413 = vld [vmem:[#allocation9 + $0x8] sm:$0x7]
        %v414 = vld [vmem:[%s409] sm:$0x1]
        %v415 = vlaneseq
        %v416 = vshrl.u32 %v415, 7
        %v417 = vadd.s32 %v416, 8
        %vm418 = vcmp.ge.s32.totalorder %v416, 1
        %vm419 = vcmp.ge.s32.totalorder %v417, 1
        %vm420 = vcmp.le.s32.totalorder %v416, 14
        %vm421 = vcmp.le.s32.totalorder %v417, 14
        %v422 = vld [vmem:[%s340] sm:$0xff]
        %v423 = vld [vmem:[%s340 + $0x8] sm:$0xff]
        %v424 = vld [vmem:[%s340 + $0x10] sm:$0xff]
        %v425 = vld [vmem:[%s340 + $0x18] sm:$0xff]
        %v426 = vld [vmem:[%s340 + $0x20] sm:$0xff]
        %v427 = vld [vmem:[%s340 + $0x28] sm:$0xff]
        %v428 = vld [vmem:[%s340 + $0x30] sm:$0xff]
        %v429 = vld [vmem:[%s340 + $0x38] sm:$0xff]
        %v430 = vld [vmem:[%s340 + $0x40] sm:$0xff]
        %v431 = vld [vmem:[%s340 + $0x48] sm:$0xff]
        %v432 = vld [vmem:[%s340 + $0x50] sm:$0xff]
        %v433 = vld [vmem:[%s340 + $0x58] sm:$0xff]
        %v434 = vld [vmem:[%s340 + $0x60] sm:$0xff]
        %v435 = vld [vmem:[%s340 + $0x68] sm:$0xff]
        %v436 = vld [vmem:[%s340 + $0x70] sm:$0xff]
        %v437 = vld [vmem:[%s340 + $0x78] sm:$0xff]
        %v438 = vld [vmem:[%s340 + $0x80] sm:$0xff]
        %v439 = vld [vmem:[%s340 + $0x88] sm:$0xff]
        %v440 = vld [vmem:[%s340 + $0x90] sm:$0xff]
        %v441 = vld [vmem:[%s340 + $0x98] sm:$0xff]
        %v442 = vld [vmem:[%s340 + $0xa0] sm:$0xff]
        %v443 = vld [vmem:[%s340 + $0xa8] sm:$0xff]
        %v444 = vld [vmem:[%s340 + $0xb0] sm:$0xff]
        %v445 = vld [vmem:[%s340 + $0xb8] sm:$0xff]
        %v446 = vld [vmem:[%s340 + $0xc0] sm:$0xff]
        %v447 = vld [vmem:[%s340 + $0xc8] sm:$0xff]
        %v448 = vld [vmem:[%s340 + $0xd0] sm:$0xff]
        %v449 = vld [vmem:[%s340 + $0xd8] sm:$0xff]
        %v450 = vld [vmem:[%s340 + $0xe0] sm:$0xff]
        %v451 = vld [vmem:[%s340 + $0xe8] sm:$0xff]
        %v452 = vld [vmem:[%s340 + $0xf0] sm:$0xff]
        %v453 = vld [vmem:[%s340 + $0xf8] sm:$0xff]
        %v454 = vperm.slane %v412, 1
        %v455 = vmul.f32 %v422, %v454
        %v456 = vmul.f32 %v423, %v454
        %v457 = vmul.f32 %v424, %v454
        %v458 = vmul.f32 %v425, %v454
        %v459 = vmul.f32 %v426, %v454
        %v460 = vmul.f32 %v427, %v454
        %v461 = vmul.f32 %v428, %v454
        %v462 = vmul.f32 %v429, %v454
        %v463 = vmul.f32 %v430, %v454
        %v464 = vmul.f32 %v431, %v454
        %v465 = vmul.f32 %v432, %v454
        %v466 = vmul.f32 %v433, %v454
        %v467 = vmul.f32 %v434, %v454
        %v468 = vmul.f32 %v435, %v454
        %v469 = vmul.f32 %v436, %v454
        %v470 = vmul.f32 %v437, %v454
        %v471 = vmul.f32 %v438, %v454
        %v472 = vmul.f32 %v439, %v454
        %v473 = vmul.f32 %v440, %v454
        %v474 = vmul.f32 %v441, %v454
        %v475 = vmul.f32 %v442, %v454
        %v476 = vmul.f32 %v443, %v454
        %v477 = vmul.f32 %v444, %v454
        %v478 = vmul.f32 %v445, %v454
        %v479 = vmul.f32 %v446, %v454
        %v480 = vmul.f32 %v447, %v454
        %v481 = vmul.f32 %v448, %v454
        %v482 = vmul.f32 %v449, %v454
        %v483 = vmul.f32 %v450, %v454
        %v484 = vmul.f32 %v451, %v454
        %v485 = vmul.f32 %v452, %v454
        %v486 = vmul.f32 %v453, %v454
        %v487 = vrot.slane %v422, 7
        %v488 = vrot.slane %v424, 7
        %v489 = vrot.slane %v426, 7
        %v490 = vrot.slane %v428, 7
        %v491 = vrot.slane %v430, 7
        %v492 = vrot.slane %v432, 7
        %v493 = vrot.slane %v434, 7
        %v494 = vrot.slane %v436, 7
        %v495 = vrot.slane %v438, 7
        %v496 = vrot.slane %v440, 7
        %v497 = vrot.slane %v442, 7
        %v498 = vrot.slane %v444, 7
        %v499 = vrot.slane %v446, 7
        %v500 = vrot.slane %v448, 7
        %v501 = vrot.slane %v450, 7
        %v502 = vrot.slane %v452, 7
        %v503 = vrot.slane %v423, 7
        %v504 = vrot.slane %v425, 7
        %v505 = vrot.slane %v427, 7
        %v506 = vrot.slane %v429, 7
        %v507 = vrot.slane %v431, 7
        %v508 = vrot.slane %v433, 7
        %v509 = vrot.slane %v435, 7
        %v510 = vrot.slane %v437, 7
        %v511 = vrot.slane %v439, 7
        %v512 = vrot.slane %v441, 7
        %v513 = vrot.slane %v443, 7
        %v514 = vrot.slane %v445, 7
        %v515 = vrot.slane %v447, 7
        %v516 = vrot.slane %v449, 7
        %v517 = vrot.slane %v451, 7
        %v518 = vrot.slane %v453, 7
        %vm519 = vcmp.lt.s32.totalorder %v416, 1
        %v520 = vsel %vm519, %v487, %v503
        %v521 = vsel %vm519, %v488, %v504
        %v522 = vsel %vm519, %v489, %v505
        %v523 = vsel %vm519, %v490, %v506
        %v524 = vsel %vm519, %v491, %v507
        %v525 = vsel %vm519, %v492, %v508
        %v526 = vsel %vm519, %v493, %v509
        %v527 = vsel %vm519, %v494, %v510
        %v528 = vsel %vm519, %v495, %v511
        %v529 = vsel %vm519, %v496, %v512
        %v530 = vsel %vm519, %v497, %v513
        %v531 = vsel %vm519, %v498, %v514
        %v532 = vsel %vm519, %v499, %v515
        %v533 = vsel %vm519, %v500, %v516
        %v534 = vsel %vm519, %v501, %v517
        %v535 = vsel %vm519, %v502, %v518
        %v536 = vsel %vm519, %v503, %v487
        %v537 = vsel %vm519, %v504, %v488
        %v538 = vsel %vm519, %v505, %v489
        %v539 = vsel %vm519, %v506, %v490
        %v540 = vsel %vm519, %v507, %v491
        %v541 = vsel %vm519, %v508, %v492
        %v542 = vsel %vm519, %v509, %v493
        %v543 = vsel %vm519, %v510, %v494
        %v544 = vsel %vm519, %v511, %v495
        %v545 = vsel %vm519, %v512, %v496
        %v546 = vsel %vm519, %v513, %v497
        %v547 = vsel %vm519, %v514, %v498
        %v548 = vsel %vm519, %v515, %v499
        %v549 = vsel %vm519, %v516, %v500
        %v550 = vsel %vm519, %v517, %v501
        %v551 = vsel %vm519, %v518, %v502
        %v552 = vsel %vm418, 1, 0
        %v553 = vsel %vm419, 1, 0
        %vm554 = vcmp.eq.s32.totalorder %v552, 1
        %vm555 = vcmp.eq.s32.totalorder %v553, 1
        %v556 = vsel %vm554, %v536, 0.0
        %v557 = vsel %vm555, %v520, 0.0
        %v558 = vsel %vm554, %v537, 0.0
        %v559 = vsel %vm555, %v521, 0.0
        %v560 = vsel %vm554, %v538, 0.0
        %v561 = vsel %vm555, %v522, 0.0
        %v562 = vsel %vm554, %v539, 0.0
        %v563 = vsel %vm555, %v523, 0.0
        %v564 = vsel %vm554, %v540, 0.0
        %v565 = vsel %vm555, %v524, 0.0
        %v566 = vsel %vm554, %v541, 0.0
        %v567 = vsel %vm555, %v525, 0.0
        %v568 = vsel %vm554, %v542, 0.0
        %v569 = vsel %vm555, %v526, 0.0
        %v570 = vsel %vm554, %v543, 0.0
        %v571 = vsel %vm555, %v527, 0.0
        %v572 = vsel %vm554, %v544, 0.0
        %v573 = vsel %vm555, %v528, 0.0
        %v574 = vsel %vm554, %v545, 0.0
        %v575 = vsel %vm555, %v529, 0.0
        %v576 = vsel %vm554, %v546, 0.0
        %v577 = vsel %vm555, %v530, 0.0
        %v578 = vsel %vm554, %v547, 0.0
        %v579 = vsel %vm555, %v531, 0.0
        %v580 = vsel %vm554, %v548, 0.0
        %v581 = vsel %vm555, %v532, 0.0
        %v582 = vsel %vm554, %v549, 0.0
        %v583 = vsel %vm555, %v533, 0.0
        %v584 = vsel %vm554, %v550, 0.0
        %v585 = vsel %vm555, %v534, 0.0
        %v586 = vsel %vm554, %v551, 0.0
        %v587 = vsel %vm555, %v535, 0.0
        %v588 = vperm.slane %v412, 0
        %v589 = vmul.f32 %v556, %v588
        %v590 = vmul.f32 %v557, %v588
        %v591 = vmul.f32 %v558, %v588
        %v592 = vmul.f32 %v559, %v588
        %v593 = vmul.f32 %v560, %v588
        %v594 = vmul.f32 %v561, %v588
        %v595 = vmul.f32 %v562, %v588
        %v596 = vmul.f32 %v563, %v588
        %v597 = vmul.f32 %v564, %v588
        %v598 = vmul.f32 %v565, %v588
        %v599 = vmul.f32 %v566, %v588
        %v600 = vmul.f32 %v567, %v588
        %v601 = vmul.f32 %v568, %v588
        %v602 = vmul.f32 %v569, %v588
        %v603 = vmul.f32 %v570, %v588
        %v604 = vmul.f32 %v571, %v588
        %v605 = vmul.f32 %v572, %v588
        %v606 = vmul.f32 %v573, %v588
        %v607 = vmul.f32 %v574, %v588
        %v608 = vmul.f32 %v575, %v588
        %v609 = vmul.f32 %v576, %v588
        %v610 = vmul.f32 %v577, %v588
        %v611 = vmul.f32 %v578, %v588
        %v612 = vmul.f32 %v579, %v588
        %v613 = vmul.f32 %v580, %v588
        %v614 = vmul.f32 %v581, %v588
        %v615 = vmul.f32 %v582, %v588
        %v616 = vmul.f32 %v583, %v588
        %v617 = vmul.f32 %v584, %v588
        %v618 = vmul.f32 %v585, %v588
        %v619 = vmul.f32 %v586, %v588
        %v620 = vmul.f32 %v587, %v588
        %v621 = vadd.f32 %v455, %v589
        %v622 = vadd.f32 %v456, %v590
        %v623 = vadd.f32 %v457, %v591
        %v624 = vadd.f32 %v458, %v592
        %v625 = vadd.f32 %v459, %v593
        %v626 = vadd.f32 %v460, %v594
        %v627 = vadd.f32 %v461, %v595
        %v628 = vadd.f32 %v462, %v596
        %v629 = vadd.f32 %v463, %v597
        %v630 = vadd.f32 %v464, %v598
        %v631 = vadd.f32 %v465, %v599
        %v632 = vadd.f32 %v466, %v600
        %v633 = vadd.f32 %v467, %v601
        %v634 = vadd.f32 %v468, %v602
        %v635 = vadd.f32 %v469, %v603
        %v636 = vadd.f32 %v470, %v604
        %v637 = vadd.f32 %v471, %v605
        %v638 = vadd.f32 %v472, %v606
        %v639 = vadd.f32 %v473, %v607
        %v640 = vadd.f32 %v474, %v608
        %v641 = vadd.f32 %v475, %v609
        %v642 = vadd.f32 %v476, %v610
        %v643 = vadd.f32 %v477, %v611
        %v644 = vadd.f32 %v478, %v612
        %v645 = vadd.f32 %v479, %v613
        %v646 = vadd.f32 %v480, %v614
        %v647 = vadd.f32 %v481, %v615
        %v648 = vadd.f32 %v482, %v616
        %v649 = vadd.f32 %v483, %v617
        %v650 = vadd.f32 %v484, %v618
        %v651 = vadd.f32 %v485, %v619
        %v652 = vadd.f32 %v486, %v620
        %v653 = vrot.slane %v422, 1
        %v654 = vrot.slane %v424, 1
        %v655 = vrot.slane %v426, 1
        %v656 = vrot.slane %v428, 1
        %v657 = vrot.slane %v430, 1
        %v658 = vrot.slane %v432, 1
        %v659 = vrot.slane %v434, 1
        %v660 = vrot.slane %v436, 1
        %v661 = vrot.slane %v438, 1
        %v662 = vrot.slane %v440, 1
        %v663 = vrot.slane %v442, 1
        %v664 = vrot.slane %v444, 1
        %v665 = vrot.slane %v446, 1
        %v666 = vrot.slane %v448, 1
        %v667 = vrot.slane %v450, 1
        %v668 = vrot.slane %v452, 1
        %v669 = vrot.slane %v423, 1
        %v670 = vrot.slane %v425, 1
        %v671 = vrot.slane %v427, 1
        %v672 = vrot.slane %v429, 1
        %v673 = vrot.slane %v431, 1
        %v674 = vrot.slane %v433, 1
        %v675 = vrot.slane %v435, 1
        %v676 = vrot.slane %v437, 1
        %v677 = vrot.slane %v439, 1
        %v678 = vrot.slane %v441, 1
        %v679 = vrot.slane %v443, 1
        %v680 = vrot.slane %v445, 1
        %v681 = vrot.slane %v447, 1
        %v682 = vrot.slane %v449, 1
        %v683 = vrot.slane %v451, 1
        %v684 = vrot.slane %v453, 1
        %vm685 = vcmp.lt.s32.totalorder %v416, 7
        %v686 = vsel %vm685, %v653, %v669
        %v687 = vsel %vm685, %v654, %v670
        %v688 = vsel %vm685, %v655, %v671
        %v689 = vsel %vm685, %v656, %v672
        %v690 = vsel %vm685, %v657, %v673
        %v691 = vsel %vm685, %v658, %v674
        %v692 = vsel %vm685, %v659, %v675
        %v693 = vsel %vm685, %v660, %v676
        %v694 = vsel %vm685, %v661, %v677
        %v695 = vsel %vm685, %v662, %v678
        %v696 = vsel %vm685, %v663, %v679
        %v697 = vsel %vm685, %v664, %v680
        %v698 = vsel %vm685, %v665, %v681
        %v699 = vsel %vm685, %v666, %v682
        %v700 = vsel %vm685, %v667, %v683
        %v701 = vsel %vm685, %v668, %v684
        %v702 = vsel %vm685, %v669, %v653
        %v703 = vsel %vm685, %v670, %v654
        %v704 = vsel %vm685, %v671, %v655
        %v705 = vsel %vm685, %v672, %v656
        %v706 = vsel %vm685, %v673, %v657
        %v707 = vsel %vm685, %v674, %v658
        %v708 = vsel %vm685, %v675, %v659
        %v709 = vsel %vm685, %v676, %v660
        %v710 = vsel %vm685, %v677, %v661
        %v711 = vsel %vm685, %v678, %v662
        %v712 = vsel %vm685, %v679, %v663
        %v713 = vsel %vm685, %v680, %v664
        %v714 = vsel %vm685, %v681, %v665
        %v715 = vsel %vm685, %v682, %v666
        %v716 = vsel %vm685, %v683, %v667
        %v717 = vsel %vm685, %v684, %v668
        %v718 = vsel %vm420, 1, 0
        %v719 = vsel %vm421, 1, 0
        %vm720 = vcmp.eq.s32.totalorder %v718, 1
        %vm721 = vcmp.eq.s32.totalorder %v719, 1
        %v722 = vsel %vm720, %v686, 0.0
        %v723 = vsel %vm721, %v702, 0.0
        %v724 = vsel %vm720, %v687, 0.0
        %v725 = vsel %vm721, %v703, 0.0
        %v726 = vsel %vm720, %v688, 0.0
        %v727 = vsel %vm721, %v704, 0.0
        %v728 = vsel %vm720, %v689, 0.0
        %v729 = vsel %vm721, %v705, 0.0
        %v730 = vsel %vm720, %v690, 0.0
        %v731 = vsel %vm721, %v706, 0.0
        %v732 = vsel %vm720, %v691, 0.0
        %v733 = vsel %vm721, %v707, 0.0
        %v734 = vsel %vm720, %v692, 0.0
        %v735 = vsel %vm721, %v708, 0.0
        %v736 = vsel %vm720, %v693, 0.0
        %v737 = vsel %vm721, %v709, 0.0
        %v738 = vsel %vm720, %v694, 0.0
        %v739 = vsel %vm721, %v710, 0.0
        %v740 = vsel %vm720, %v695, 0.0
        %v741 = vsel %vm721, %v711, 0.0
        %v742 = vsel %vm720, %v696, 0.0
        %v743 = vsel %vm721, %v712, 0.0
        %v744 = vsel %vm720, %v697, 0.0
        %v745 = vsel %vm721, %v713, 0.0
        %v746 = vsel %vm720, %v698, 0.0
        %v747 = vsel %vm721, %v714, 0.0
        %v748 = vsel %vm720, %v699, 0.0
        %v749 = vsel %vm721, %v715, 0.0
        %v750 = vsel %vm720, %v700, 0.0
        %v751 = vsel %vm721, %v716, 0.0
        %v752 = vsel %vm720, %v701, 0.0
        %v753 = vsel %vm721, %v717, 0.0
        %v754 = vperm.slane %v412, 2
        %v755 = vmul.f32 %v722, %v754
        %v756 = vmul.f32 %v723, %v754
        %v757 = vmul.f32 %v724, %v754
        %v758 = vmul.f32 %v725, %v754
        %v759 = vmul.f32 %v726, %v754
        %v760 = vmul.f32 %v727, %v754
        %v761 = vmul.f32 %v728, %v754
        %v762 = vmul.f32 %v729, %v754
        %v763 = vmul.f32 %v730, %v754
        %v764 = vmul.f32 %v731, %v754
        %v765 = vmul.f32 %v732, %v754
        %v766 = vmul.f32 %v733, %v754
        %v767 = vmul.f32 %v734, %v754
        %v768 = vmul.f32 %v735, %v754
        %v769 = vmul.f32 %v736, %v754
        %v770 = vmul.f32 %v737, %v754
        %v771 = vmul.f32 %v738, %v754
        %v772 = vmul.f32 %v739, %v754
        %v773 = vmul.f32 %v740, %v754
        %v774 = vmul.f32 %v741, %v754
        %v775 = vmul.f32 %v742, %v754
        %v776 = vmul.f32 %v743, %v754
        %v777 = vmul.f32 %v744, %v754
        %v778 = vmul.f32 %v745, %v754
        %v779 = vmul.f32 %v746, %v754
        %v780 = vmul.f32 %v747, %v754
        %v781 = vmul.f32 %v748, %v754
        %v782 = vmul.f32 %v749, %v754
        %v783 = vmul.f32 %v750, %v754
        %v784 = vmul.f32 %v751, %v754
        %v785 = vmul.f32 %v752, %v754
        %v786 = vmul.f32 %v753, %v754
        %v787 = vadd.f32 %v621, %v755
        %v788 = vadd.f32 %v622, %v756
        %v789 = vadd.f32 %v623, %v757
        %v790 = vadd.f32 %v624, %v758
        %v791 = vadd.f32 %v625, %v759
        %v792 = vadd.f32 %v626, %v760
        %v793 = vadd.f32 %v627, %v761
        %v794 = vadd.f32 %v628, %v762
        %v795 = vadd.f32 %v629, %v763
        %v796 = vadd.f32 %v630, %v764
        %v797 = vadd.f32 %v631, %v765
        %v798 = vadd.f32 %v632, %v766
        %v799 = vadd.f32 %v633, %v767
        %v800 = vadd.f32 %v634, %v768
        %v801 = vadd.f32 %v635, %v769
        %v802 = vadd.f32 %v636, %v770
        %v803 = vadd.f32 %v637, %v771
        %v804 = vadd.f32 %v638, %v772
        %v805 = vadd.f32 %v639, %v773
        %v806 = vadd.f32 %v640, %v774
        %v807 = vadd.f32 %v641, %v775
        %v808 = vadd.f32 %v642, %v776
        %v809 = vadd.f32 %v643, %v777
        %v810 = vadd.f32 %v644, %v778
        %v811 = vadd.f32 %v645, %v779
        %v812 = vadd.f32 %v646, %v780
        %v813 = vadd.f32 %v647, %v781
        %v814 = vadd.f32 %v648, %v782
        %v815 = vadd.f32 %v649, %v783
        %v816 = vadd.f32 %v650, %v784
        %v817 = vadd.f32 %v651, %v785
        %v818 = vadd.f32 %v652, %v786
        %v820 = vperm.slane %v414, 0
        %v822 = vadd.f32 %v787, %v820
        %v823 = vadd.f32 %v788, %v820
        %v824 = vadd.f32 %v789, %v820
        %v825 = vadd.f32 %v790, %v820
        %v826 = vadd.f32 %v791, %v820
        %v827 = vadd.f32 %v792, %v820
        %v828 = vadd.f32 %v793, %v820
        %v829 = vadd.f32 %v794, %v820
        %v830 = vadd.f32 %v795, %v820
        %v831 = vadd.f32 %v796, %v820
        %v832 = vadd.f32 %v797, %v820
        %v833 = vadd.f32 %v798, %v820
        %v834 = vadd.f32 %v799, %v820
        %v835 = vadd.f32 %v800, %v820
        %v836 = vadd.f32 %v801, %v820
        %v837 = vadd.f32 %v802, %v820
        %v838 = vadd.f32 %v803, %v820
        %v839 = vadd.f32 %v804, %v820
        %v840 = vadd.f32 %v805, %v820
        %v841 = vadd.f32 %v806, %v820
        %v842 = vadd.f32 %v807, %v820
        %v843 = vadd.f32 %v808, %v820
        %v844 = vadd.f32 %v809, %v820
        %v845 = vadd.f32 %v810, %v820
        %v846 = vadd.f32 %v811, %v820
        %v847 = vadd.f32 %v812, %v820
        %v848 = vadd.f32 %v813, %v820
        %v849 = vadd.f32 %v814, %v820
        %v850 = vadd.f32 %v815, %v820
        %v851 = vadd.f32 %v816, %v820
        %v852 = vadd.f32 %v817, %v820
        %v853 = vadd.f32 %v818, %v820
        %854 = vst [vmem:[#allocation2] sm:$0xff] %v822
        %855 = vst [vmem:[#allocation2 + $0x8] sm:$0xff] %v823
        %856 = vst [vmem:[#allocation2 + $0x10] sm:$0xff] %v824
        %857 = vst [vmem:[#allocation2 + $0x18] sm:$0xff] %v825
        %858 = vst [vmem:[#allocation2 + $0x20] sm:$0xff] %v826
        %859 = vst [vmem:[#allocation2 + $0x28] sm:$0xff] %v827
        %860 = vst [vmem:[#allocation2 + $0x30] sm:$0xff] %v828
        %861 = vst [vmem:[#allocation2 + $0x38] sm:$0xff] %v829
        %862 = vst [vmem:[#allocation2 + $0x40] sm:$0xff] %v830
        %863 = vst [vmem:[#allocation2 + $0x48] sm:$0xff] %v831
        %864 = vst [vmem:[#allocation2 + $0x50] sm:$0xff] %v832
        %865 = vst [vmem:[#allocation2 + $0x58] sm:$0xff] %v833
        %866 = vst [vmem:[#allocation2 + $0x60] sm:$0xff] %v834
        %867 = vst [vmem:[#allocation2 + $0x68] sm:$0xff] %v835
        %868 = vst [vmem:[#allocation2 + $0x70] sm:$0xff] %v836
        %869 = vst [vmem:[#allocation2 + $0x78] sm:$0xff] %v837
        %870 = vst [vmem:[#allocation2 + $0x80] sm:$0xff] %v838
        %871 = vst [vmem:[#allocation2 + $0x88] sm:$0xff] %v839
        %872 = vst [vmem:[#allocation2 + $0x90] sm:$0xff] %v840
        %873 = vst [vmem:[#allocation2 + $0x98] sm:$0xff] %v841
        %874 = vst [vmem:[#allocation2 + $0xa0] sm:$0xff] %v842
        %875 = vst [vmem:[#allocation2 + $0xa8] sm:$0xff] %v843
        %876 = vst [vmem:[#allocation2 + $0xb0] sm:$0xff] %v844
        %877 = vst [vmem:[#allocation2 + $0xb8] sm:$0xff] %v845
        %878 = vst [vmem:[#allocation2 + $0xc0] sm:$0xff] %v846
        %879 = vst [vmem:[#allocation2 + $0xc8] sm:$0xff] %v847
        %880 = vst [vmem:[#allocation2 + $0xd0] sm:$0xff] %v848
        %881 = vst [vmem:[#allocation2 + $0xd8] sm:$0xff] %v849
        %882 = vst [vmem:[#allocation2 + $0xe0] sm:$0xff] %v850
        %883 = vst [vmem:[#allocation2 + $0xe8] sm:$0xff] %v851
        %884 = vst [vmem:[#allocation2 + $0xf0] sm:$0xff] %v852
        %885 = vst [vmem:[#allocation2 + $0xf8] sm:$0xff] %v853
        %s886 = scalar_lea.vmem [#allocation2], 16
        %v887 = vld [vmem:[%s886] sm:$0xff]
        %v888 = vld [vmem:[%s886 + $0x8] sm:$0xff]
        %v889 = vld [vmem:[%s886 + $0x10] sm:$0xff]
        %v890 = vld [vmem:[%s886 + $0x18] sm:$0xff]
        %v891 = vld [vmem:[%s886 + $0x20] sm:$0xff]
        %v892 = vld [vmem:[%s886 + $0x28] sm:$0xff]
        %v893 = vld [vmem:[%s886 + $0x30] sm:$0xff]
        %v894 = vld [vmem:[%s886 + $0x38] sm:$0xff]
        %v895 = vld [vmem:[%s886 + $0x40] sm:$0xff]
        %v896 = vld [vmem:[%s886 + $0x48] sm:$0xff]
        %v897 = vld [vmem:[%s886 + $0x50] sm:$0xff]
        %v898 = vld [vmem:[%s886 + $0x58] sm:$0xff]
        %v899 = vld [vmem:[%s886 + $0x60] sm:$0xff]
        %v900 = vld [vmem:[%s886 + $0x68] sm:$0xff]
        %v901 = vld [vmem:[%s886 + $0x70] sm:$0xff]
        %v902 = vld [vmem:[%s886 + $0x78] sm:$0xff]
        %v903 = vld [vmem:[%s886 + $0x80] sm:$0xff]
        %v904 = vld [vmem:[%s886 + $0x88] sm:$0xff]
        %v905 = vld [vmem:[%s886 + $0x90] sm:$0xff]
        %v906 = vld [vmem:[%s886 + $0x98] sm:$0xff]
        %v907 = vld [vmem:[%s886 + $0xa0] sm:$0xff]
        %v908 = vld [vmem:[%s886 + $0xa8] sm:$0xff]
        %v909 = vld [vmem:[%s886 + $0xb0] sm:$0xff]
        %v910 = vld [vmem:[%s886 + $0xb8] sm:$0xff]
        %v911 = vld [vmem:[%s886 + $0xc0] sm:$0xff]
        %v912 = vld [vmem:[%s886 + $0xc8] sm:$0xff]
        %v913 = vld [vmem:[%s886 + $0xd0] sm:$0xff]
        %v914 = vld [vmem:[%s886 + $0xd8] sm:$0xff]
        %v915 = vld [vmem:[%s886 + $0xe0] sm:$0xff]
        %v916 = vld [vmem:[%s886 + $0xe8] sm:$0xff]
        %v917 = vperm.slane %v411, 1
        %v918 = vmul.f32 %v422, %v917
        %v919 = vmul.f32 %v423, %v917
        %v920 = vmul.f32 %v424, %v917
        %v921 = vmul.f32 %v425, %v917
        %v922 = vmul.f32 %v426, %v917
        %v923 = vmul.f32 %v427, %v917
        %v924 = vmul.f32 %v428, %v917
        %v925 = vmul.f32 %v429, %v917
        %v926 = vmul.f32 %v430, %v917
        %v927 = vmul.f32 %v431, %v917
        %v928 = vmul.f32 %v432, %v917
        %v929 = vmul.f32 %v433, %v917
        %v930 = vmul.f32 %v434, %v917
        %v931 = vmul.f32 %v435, %v917
        %v932 = vmul.f32 %v436, %v917
        %v933 = vmul.f32 %v437, %v917
        %v934 = vmul.f32 %v438, %v917
        %v935 = vmul.f32 %v439, %v917
        %v936 = vmul.f32 %v440, %v917
        %v937 = vmul.f32 %v441, %v917
        %v938 = vmul.f32 %v442, %v917
        %v939 = vmul.f32 %v443, %v917
        %v940 = vmul.f32 %v444, %v917
        %v941 = vmul.f32 %v445, %v917
        %v942 = vmul.f32 %v446, %v917
        %v943 = vmul.f32 %v447, %v917
        %v944 = vmul.f32 %v448, %v917
        %v945 = vmul.f32 %v449, %v917
        %v946 = vmul.f32 %v450, %v917
        %v947 = vmul.f32 %v451, %v917
        %v948 = vperm.slane %v411, 0
        %v949 = vmul.f32 %v556, %v948
        %v950 = vmul.f32 %v557, %v948
        %v951 = vmul.f32 %v558, %v948
        %v952 = vmul.f32 %v559, %v948
        %v953 = vmul.f32 %v560, %v948
        %v954 = vmul.f32 %v561, %v948
        %v955 = vmul.f32 %v562, %v948
        %v956 = vmul.f32 %v563, %v948
        %v957 = vmul.f32 %v564, %v948
        %v958 = vmul.f32 %v565, %v948
        %v959 = vmul.f32 %v566, %v948
        %v960 = vmul.f32 %v567, %v948
        %v961 = vmul.f32 %v568, %v948
        %v962 = vmul.f32 %v569, %v948
        %v963 = vmul.f32 %v570, %v948
        %v964 = vmul.f32 %v571, %v948
        %v965 = vmul.f32 %v572, %v948
        %v966 = vmul.f32 %v573, %v948
        %v967 = vmul.f32 %v574, %v948
        %v968 = vmul.f32 %v575, %v948
        %v969 = vmul.f32 %v576, %v948
        %v970 = vmul.f32 %v577, %v948
        %v971 = vmul.f32 %v578, %v948
        %v972 = vmul.f32 %v579, %v948
        %v973 = vmul.f32 %v580, %v948
        %v974 = vmul.f32 %v581, %v948
        %v975 = vmul.f32 %v582, %v948
        %v976 = vmul.f32 %v583, %v948
        %v977 = vmul.f32 %v584, %v948
        %v978 = vmul.f32 %v585, %v948
        %v979 = vadd.f32 %v918, %v949
        %v980 = vadd.f32 %v919, %v950
        %v981 = vadd.f32 %v920, %v951
        %v982 = vadd.f32 %v921, %v952
        %v983 = vadd.f32 %v922, %v953
        %v984 = vadd.f32 %v923, %v954
        %v985 = vadd.f32 %v924, %v955
        %v986 = vadd.f32 %v925, %v956
        %v987 = vadd.f32 %v926, %v957
        %v988 = vadd.f32 %v927, %v958
        %v989 = vadd.f32 %v928, %v959
        %v990 = vadd.f32 %v929, %v960
        %v991 = vadd.f32 %v930, %v961
        %v992 = vadd.f32 %v931, %v962
        %v993 = vadd.f32 %v932, %v963
        %v994 = vadd.f32 %v933, %v964
        %v995 = vadd.f32 %v934, %v965
        %v996 = vadd.f32 %v935, %v966
        %v997 = vadd.f32 %v936, %v967
        %v998 = vadd.f32 %v937, %v968
        %v999 = vadd.f32 %v938, %v969
        %v1000 = vadd.f32 %v939, %v970
        %v1001 = vadd.f32 %v940, %v971
        %v1002 = vadd.f32 %v941, %v972
        %v1003 = vadd.f32 %v942, %v973
        %v1004 = vadd.f32 %v943, %v974
        %v1005 = vadd.f32 %v944, %v975
        %v1006 = vadd.f32 %v945, %v976
        %v1007 = vadd.f32 %v946, %v977
        %v1008 = vadd.f32 %v947, %v978
        %v1009 = vperm.slane %v411, 2
        %v1010 = vmul.f32 %v722, %v1009
        %v1011 = vmul.f32 %v723, %v1009
        %v1012 = vmul.f32 %v724, %v1009
        %v1013 = vmul.f32 %v725, %v1009
        %v1014 = vmul.f32 %v726, %v1009
        %v1015 = vmul.f32 %v727, %v1009
        %v1016 = vmul.f32 %v728, %v1009
        %v1017 = vmul.f32 %v729, %v1009
        %v1018 = vmul.f32 %v730, %v1009
        %v1019 = vmul.f32 %v731, %v1009
        %v1020 = vmul.f32 %v732, %v1009
        %v1021 = vmul.f32 %v733, %v1009
        %v1022 = vmul.f32 %v734, %v1009
        %v1023 = vmul.f32 %v735, %v1009
        %v1024 = vmul.f32 %v736, %v1009
        %v1025 = vmul.f32 %v737, %v1009
        %v1026 = vmul.f32 %v738, %v1009
        %v1027 = vmul.f32 %v739, %v1009
        %v1028 = vmul.f32 %v740, %v1009
        %v1029 = vmul.f32 %v741, %v1009
        %v1030 = vmul.f32 %v742, %v1009
        %v1031 = vmul.f32 %v743, %v1009
        %v1032 = vmul.f32 %v744, %v1009
        %v1033 = vmul.f32 %v745, %v1009
        %v1034 = vmul.f32 %v746, %v1009
        %v1035 = vmul.f32 %v747, %v1009
        %v1036 = vmul.f32 %v748, %v1009
        %v1037 = vmul.f32 %v749, %v1009
        %v1038 = vmul.f32 %v750, %v1009
        %v1039 = vmul.f32 %v751, %v1009
        %v1040 = vadd.f32 %v979, %v1010
        %v1041 = vadd.f32 %v980, %v1011
        %v1042 = vadd.f32 %v981, %v1012
        %v1043 = vadd.f32 %v982, %v1013
        %v1044 = vadd.f32 %v983, %v1014
        %v1045 = vadd.f32 %v984, %v1015
        %v1046 = vadd.f32 %v985, %v1016
        %v1047 = vadd.f32 %v986, %v1017
        %v1048 = vadd.f32 %v987, %v1018
        %v1049 = vadd.f32 %v988, %v1019
        %v1050 = vadd.f32 %v989, %v1020
        %v1051 = vadd.f32 %v990, %v1021
        %v1052 = vadd.f32 %v991, %v1022
        %v1053 = vadd.f32 %v992, %v1023
        %v1054 = vadd.f32 %v993, %v1024
        %v1055 = vadd.f32 %v994, %v1025
        %v1056 = vadd.f32 %v995, %v1026
        %v1057 = vadd.f32 %v996, %v1027
        %v1058 = vadd.f32 %v997, %v1028
        %v1059 = vadd.f32 %v998, %v1029
        %v1060 = vadd.f32 %v999, %v1030
        %v1061 = vadd.f32 %v1000, %v1031
        %v1062 = vadd.f32 %v1001, %v1032
        %v1063 = vadd.f32 %v1002, %v1033
        %v1064 = vadd.f32 %v1003, %v1034
        %v1065 = vadd.f32 %v1004, %v1035
        %v1066 = vadd.f32 %v1005, %v1036
        %v1067 = vadd.f32 %v1006, %v1037
        %v1068 = vadd.f32 %v1007, %v1038
        %v1069 = vadd.f32 %v1008, %v1039
        %v1070 = vadd.f32 %v887, %v1040
        %v1071 = vadd.f32 %v888, %v1041
        %v1072 = vadd.f32 %v889, %v1042
        %v1073 = vadd.f32 %v890, %v1043
        %v1074 = vadd.f32 %v891, %v1044
        %v1075 = vadd.f32 %v892, %v1045
        %v1076 = vadd.f32 %v893, %v1046
        %v1077 = vadd.f32 %v894, %v1047
        %v1078 = vadd.f32 %v895, %v1048
        %v1079 = vadd.f32 %v896, %v1049
        %v1080 = vadd.f32 %v897, %v1050
        %v1081 = vadd.f32 %v898, %v1051
        %v1082 = vadd.f32 %v899, %v1052
        %v1083 = vadd.f32 %v900, %v1053
        %v1084 = vadd.f32 %v901, %v1054
        %v1085 = vadd.f32 %v902, %v1055
        %v1086 = vadd.f32 %v903, %v1056
        %v1087 = vadd.f32 %v904, %v1057
        %v1088 = vadd.f32 %v905, %v1058
        %v1089 = vadd.f32 %v906, %v1059
        %v1090 = vadd.f32 %v907, %v1060
        %v1091 = vadd.f32 %v908, %v1061
        %v1092 = vadd.f32 %v909, %v1062
        %v1093 = vadd.f32 %v910, %v1063
        %v1094 = vadd.f32 %v911, %v1064
        %v1095 = vadd.f32 %v912, %v1065
        %v1096 = vadd.f32 %v913, %v1066
        %v1097 = vadd.f32 %v914, %v1067
        %v1098 = vadd.f32 %v915, %v1068
        %v1099 = vadd.f32 %v916, %v1069
        %1100 = vst [vmem:[%s886] sm:$0xff] %v1070
        %1101 = vst [vmem:[%s886 + $0x8] sm:$0xff] %v1071
        %1102 = vst [vmem:[%s886 + $0x10] sm:$0xff] %v1072
        %1103 = vst [vmem:[%s886 + $0x18] sm:$0xff] %v1073
        %1104 = vst [vmem:[%s886 + $0x20] sm:$0xff] %v1074
        %1105 = vst [vmem:[%s886 + $0x28] sm:$0xff] %v1075
        %1106 = vst [vmem:[%s886 + $0x30] sm:$0xff] %v1076
        %1107 = vst [vmem:[%s886 + $0x38] sm:$0xff] %v1077
        %1108 = vst [vmem:[%s886 + $0x40] sm:$0xff] %v1078
        %1109 = vst [vmem:[%s886 + $0x48] sm:$0xff] %v1079
        %1110 = vst [vmem:[%s886 + $0x50] sm:$0xff] %v1080
        %1111 = vst [vmem:[%s886 + $0x58] sm:$0xff] %v1081
        %1112 = vst [vmem:[%s886 + $0x60] sm:$0xff] %v1082
        %1113 = vst [vmem:[%s886 + $0x68] sm:$0xff] %v1083
        %1114 = vst [vmem:[%s886 + $0x70] sm:$0xff] %v1084
        %1115 = vst [vmem:[%s886 + $0x78] sm:$0xff] %v1085
        %1116 = vst [vmem:[%s886 + $0x80] sm:$0xff] %v1086
        %1117 = vst [vmem:[%s886 + $0x88] sm:$0xff] %v1087
        %1118 = vst [vmem:[%s886 + $0x90] sm:$0xff] %v1088
        %1119 = vst [vmem:[%s886 + $0x98] sm:$0xff] %v1089
        %1120 = vst [vmem:[%s886 + $0xa0] sm:$0xff] %v1090
        %1121 = vst [vmem:[%s886 + $0xa8] sm:$0xff] %v1091
        %1122 = vst [vmem:[%s886 + $0xb0] sm:$0xff] %v1092
        %1123 = vst [vmem:[%s886 + $0xb8] sm:$0xff] %v1093
        %1124 = vst [vmem:[%s886 + $0xc0] sm:$0xff] %v1094
        %1125 = vst [vmem:[%s886 + $0xc8] sm:$0xff] %v1095
        %1126 = vst [vmem:[%s886 + $0xd0] sm:$0xff] %v1096
        %1127 = vst [vmem:[%s886 + $0xd8] sm:$0xff] %v1097
        %1128 = vst [vmem:[%s886 + $0xe0] sm:$0xff] %v1098
        %1129 = vst [vmem:[%s886 + $0xe8] sm:$0xff] %v1099
        %v1130 = vld [vmem:[#allocation2] sm:$0xff]
        %v1131 = vld [vmem:[#allocation2 + $0x8] sm:$0xff]
        %v1132 = vld [vmem:[#allocation2 + $0x10] sm:$0xff]
        %v1133 = vld [vmem:[#allocation2 + $0x18] sm:$0xff]
        %v1134 = vld [vmem:[#allocation2 + $0x20] sm:$0xff]
        %v1135 = vld [vmem:[#allocation2 + $0x28] sm:$0xff]
        %v1136 = vld [vmem:[#allocation2 + $0x30] sm:$0xff]
        %v1137 = vld [vmem:[#allocation2 + $0x38] sm:$0xff]
        %v1138 = vld [vmem:[#allocation2 + $0x40] sm:$0xff]
        %v1139 = vld [vmem:[#allocation2 + $0x48] sm:$0xff]
        %v1140 = vld [vmem:[#allocation2 + $0x50] sm:$0xff]
        %v1141 = vld [vmem:[#allocation2 + $0x58] sm:$0xff]
        %v1142 = vld [vmem:[#allocation2 + $0x60] sm:$0xff]
        %v1143 = vld [vmem:[#allocation2 + $0x68] sm:$0xff]
        %v1144 = vld [vmem:[#allocation2 + $0x70] sm:$0xff]
        %v1145 = vld [vmem:[#allocation2 + $0x78] sm:$0xff]
        %v1146 = vld [vmem:[#allocation2 + $0x80] sm:$0xff]
        %v1147 = vld [vmem:[#allocation2 + $0x88] sm:$0xff]
        %v1148 = vld [vmem:[#allocation2 + $0x90] sm:$0xff]
        %v1149 = vld [vmem:[#allocation2 + $0x98] sm:$0xff]
        %v1150 = vld [vmem:[#allocation2 + $0xa0] sm:$0xff]
        %v1151 = vld [vmem:[#allocation2 + $0xa8] sm:$0xff]
        %v1152 = vld [vmem:[#allocation2 + $0xb0] sm:$0xff]
        %v1153 = vld [vmem:[#allocation2 + $0xb8] sm:$0xff]
        %v1154 = vld [vmem:[#allocation2 + $0xc0] sm:$0xff]
        %v1155 = vld [vmem:[#allocation2 + $0xc8] sm:$0xff]
        %v1156 = vld [vmem:[#allocation2 + $0xd0] sm:$0xff]
        %v1157 = vld [vmem:[#allocation2 + $0xd8] sm:$0xff]
        %v1158 = vld [vmem:[#allocation2 + $0xe0] sm:$0xff]
        %v1159 = vld [vmem:[#allocation2 + $0xe8] sm:$0xff]
        %v1160 = vperm.slane %v413, 1
        %v1161 = vmul.f32 %v424, %v1160
        %v1162 = vmul.f32 %v425, %v1160
        %v1163 = vmul.f32 %v426, %v1160
        %v1164 = vmul.f32 %v427, %v1160
        %v1165 = vmul.f32 %v428, %v1160
        %v1166 = vmul.f32 %v429, %v1160
        %v1167 = vmul.f32 %v430, %v1160
        %v1168 = vmul.f32 %v431, %v1160
        %v1169 = vmul.f32 %v432, %v1160
        %v1170 = vmul.f32 %v433, %v1160
        %v1171 = vmul.f32 %v434, %v1160
        %v1172 = vmul.f32 %v435, %v1160
        %v1173 = vmul.f32 %v436, %v1160
        %v1174 = vmul.f32 %v437, %v1160
        %v1175 = vmul.f32 %v438, %v1160
        %v1176 = vmul.f32 %v439, %v1160
        %v1177 = vmul.f32 %v440, %v1160
        %v1178 = vmul.f32 %v441, %v1160
        %v1179 = vmul.f32 %v442, %v1160
        %v1180 = vmul.f32 %v443, %v1160
        %v1181 = vmul.f32 %v444, %v1160
        %v1182 = vmul.f32 %v445, %v1160
        %v1183 = vmul.f32 %v446, %v1160
        %v1184 = vmul.f32 %v447, %v1160
        %v1185 = vmul.f32 %v448, %v1160
        %v1186 = vmul.f32 %v449, %v1160
        %v1187 = vmul.f32 %v450, %v1160
        %v1188 = vmul.f32 %v451, %v1160
        %v1189 = vmul.f32 %v452, %v1160
        %v1190 = vmul.f32 %v453, %v1160
        %v1191 = vperm.slane %v413, 0
        %v1192 = vmul.f32 %v558, %v1191
        %v1193 = vmul.f32 %v559, %v1191
        %v1194 = vmul.f32 %v560, %v1191
        %v1195 = vmul.f32 %v561, %v1191
        %v1196 = vmul.f32 %v562, %v1191
        %v1197 = vmul.f32 %v563, %v1191
        %v1198 = vmul.f32 %v564, %v1191
        %v1199 = vmul.f32 %v565, %v1191
        %v1200 = vmul.f32 %v566, %v1191
        %v1201 = vmul.f32 %v567, %v1191
        %v1202 = vmul.f32 %v568, %v1191
        %v1203 = vmul.f32 %v569, %v1191
        %v1204 = vmul.f32 %v570, %v1191
        %v1205 = vmul.f32 %v571, %v1191
        %v1206 = vmul.f32 %v572, %v1191
        %v1207 = vmul.f32 %v573, %v1191
        %v1208 = vmul.f32 %v574, %v1191
        %v1209 = vmul.f32 %v575, %v1191
        %v1210 = vmul.f32 %v576, %v1191
        %v1211 = vmul.f32 %v577, %v1191
        %v1212 = vmul.f32 %v578, %v1191
        %v1213 = vmul.f32 %v579, %v1191
        %v1214 = vmul.f32 %v580, %v1191
        %v1215 = vmul.f32 %v581, %v1191
        %v1216 = vmul.f32 %v582, %v1191
        %v1217 = vmul.f32 %v583, %v1191
        %v1218 = vmul.f32 %v584, %v1191
        %v1219 = vmul.f32 %v585, %v1191
        %v1220 = vmul.f32 %v586, %v1191
        %v1221 = vmul.f32 %v587, %v1191
        %v1222 = vadd.f32 %v1161, %v1192
        %v1223 = vadd.f32 %v1162, %v1193
        %v1224 = vadd.f32 %v1163, %v1194
        %v1225 = vadd.f32 %v1164, %v1195
        %v1226 = vadd.f32 %v1165, %v1196
        %v1227 = vadd.f32 %v1166, %v1197
        %v1228 = vadd.f32 %v1167, %v1198
        %v1229 = vadd.f32 %v1168, %v1199
        %v1230 = vadd.f32 %v1169, %v1200
        %v1231 = vadd.f32 %v1170, %v1201
        %v1232 = vadd.f32 %v1171, %v1202
        %v1233 = vadd.f32 %v1172, %v1203
        %v1234 = vadd.f32 %v1173, %v1204
        %v1235 = vadd.f32 %v1174, %v1205
        %v1236 = vadd.f32 %v1175, %v1206
        %v1237 = vadd.f32 %v1176, %v1207
        %v1238 = vadd.f32 %v1177, %v1208
        %v1239 = vadd.f32 %v1178, %v1209
        %v1240 = vadd.f32 %v1179, %v1210
        %v1241 = vadd.f32 %v1180, %v1211
        %v1242 = vadd.f32 %v1181, %v1212
        %v1243 = vadd.f32 %v1182, %v1213
        %v1244 = vadd.f32 %v1183, %v1214
        %v1245 = vadd.f32 %v1184, %v1215
        %v1246 = vadd.f32 %v1185, %v1216
        %v1247 = vadd.f32 %v1186, %v1217
        %v1248 = vadd.f32 %v1187, %v1218
        %v1249 = vadd.f32 %v1188, %v1219
        %v1250 = vadd.f32 %v1189, %v1220
        %v1251 = vadd.f32 %v1190, %v1221
        %v1252 = vperm.slane %v413, 2
        %v1253 = vmul.f32 %v724, %v1252
        %v1254 = vmul.f32 %v725, %v1252
        %v1255 = vmul.f32 %v726, %v1252
        %v1256 = vmul.f32 %v727, %v1252
        %v1257 = vmul.f32 %v728, %v1252
        %v1258 = vmul.f32 %v729, %v1252
        %v1259 = vmul.f32 %v730, %v1252
        %v1260 = vmul.f32 %v731, %v1252
        %v1261 = vmul.f32 %v732, %v1252
        %v1262 = vmul.f32 %v733, %v1252
        %v1263 = vmul.f32 %v734, %v1252
        %v1264 = vmul.f32 %v735, %v1252
        %v1265 = vmul.f32 %v736, %v1252
        %v1266 = vmul.f32 %v737, %v1252
        %v1267 = vmul.f32 %v738, %v1252
        %v1268 = vmul.f32 %v739, %v1252
        %v1269 = vmul.f32 %v740, %v1252
        %v1270 = vmul.f32 %v741, %v1252
        %v1271 = vmul.f32 %v742, %v1252
        %v1272 = vmul.f32 %v743, %v1252
        %v1273 = vmul.f32 %v744, %v1252
        %v1274 = vmul.f32 %v745, %v1252
        %v1275 = vmul.f32 %v746, %v1252
        %v1276 = vmul.f32 %v747, %v1252
        %v1277 = vmul.f32 %v748, %v1252
        %v1278 = vmul.f32 %v749, %v1252
        %v1279 = vmul.f32 %v750, %v1252
        %v1280 = vmul.f32 %v751, %v1252
        %v1281 = vmul.f32 %v752, %v1252
        %v1282 = vmul.f32 %v753, %v1252
        %v1283 = vadd.f32 %v1222, %v1253
        %v1284 = vadd.f32 %v1223, %v1254
        %v1285 = vadd.f32 %v1224, %v1255
        %v1286 = vadd.f32 %v1225, %v1256
        %v1287 = vadd.f32 %v1226, %v1257
        %v1288 = vadd.f32 %v1227, %v1258
        %v1289 = vadd.f32 %v1228, %v1259
        %v1290 = vadd.f32 %v1229, %v1260
        %v1291 = vadd.f32 %v1230, %v1261
        %v1292 = vadd.f32 %v1231, %v1262
        %v1293 = vadd.f32 %v1232, %v1263
        %v1294 = vadd.f32 %v1233, %v1264
        %v1295 = vadd.f32 %v1234, %v1265
        %v1296 = vadd.f32 %v1235, %v1266
        %v1297 = vadd.f32 %v1236, %v1267
        %v1298 = vadd.f32 %v1237, %v1268
        %v1299 = vadd.f32 %v1238, %v1269
        %v1300 = vadd.f32 %v1239, %v1270
        %v1301 = vadd.f32 %v1240, %v1271
        %v1302 = vadd.f32 %v1241, %v1272
        %v1303 = vadd.f32 %v1242, %v1273
        %v1304 = vadd.f32 %v1243, %v1274
        %v1305 = vadd.f32 %v1244, %v1275
        %v1306 = vadd.f32 %v1245, %v1276
        %v1307 = vadd.f32 %v1246, %v1277
        %v1308 = vadd.f32 %v1247, %v1278
        %v1309 = vadd.f32 %v1248, %v1279
        %v1310 = vadd.f32 %v1249, %v1280
        %v1311 = vadd.f32 %v1250, %v1281
        %v1312 = vadd.f32 %v1251, %v1282
        %v1313 = vadd.f32 %v1130, %v1283
        %v1314 = vadd.f32 %v1131, %v1284
        %v1315 = vadd.f32 %v1132, %v1285
        %v1316 = vadd.f32 %v1133, %v1286
        %v1317 = vadd.f32 %v1134, %v1287
        %v1318 = vadd.f32 %v1135, %v1288
        %v1319 = vadd.f32 %v1136, %v1289
        %v1320 = vadd.f32 %v1137, %v1290
        %v1321 = vadd.f32 %v1138, %v1291
        %v1322 = vadd.f32 %v1139, %v1292
        %v1323 = vadd.f32 %v1140, %v1293
        %v1324 = vadd.f32 %v1141, %v1294
        %v1325 = vadd.f32 %v1142, %v1295
        %v1326 = vadd.f32 %v1143, %v1296
        %v1327 = vadd.f32 %v1144, %v1297
        %v1328 = vadd.f32 %v1145, %v1298
        %v1329 = vadd.f32 %v1146, %v1299
        %v1330 = vadd.f32 %v1147, %v1300
        %v1331 = vadd.f32 %v1148, %v1301
        %v1332 = vadd.f32 %v1149, %v1302
        %v1333 = vadd.f32 %v1150, %v1303
        %v1334 = vadd.f32 %v1151, %v1304
        %v1335 = vadd.f32 %v1152, %v1305
        %v1336 = vadd.f32 %v1153, %v1306
        %v1337 = vadd.f32 %v1154, %v1307
        %v1338 = vadd.f32 %v1155, %v1308
        %v1339 = vadd.f32 %v1156, %v1309
        %v1340 = vadd.f32 %v1157, %v1310
        %v1341 = vadd.f32 %v1158, %v1311
        %v1342 = vadd.f32 %v1159, %v1312
        %1343 = vst [vmem:[#allocation2] sm:$0xff] %v1313
        %1344 = vst [vmem:[#allocation2 + $0x8] sm:$0xff] %v1314
        %1345 = vst [vmem:[#allocation2 + $0x10] sm:$0xff] %v1315
        %1346 = vst [vmem:[#allocation2 + $0x18] sm:$0xff] %v1316
        %1347 = vst [vmem:[#allocation2 + $0x20] sm:$0xff] %v1317
        %1348 = vst [vmem:[#allocation2 + $0x28] sm:$0xff] %v1318
        %1349 = vst [vmem:[#allocation2 + $0x30] sm:$0xff] %v1319
        %1350 = vst [vmem:[#allocation2 + $0x38] sm:$0xff] %v1320
        %1351 = vst [vmem:[#allocation2 + $0x40] sm:$0xff] %v1321
        %1352 = vst [vmem:[#allocation2 + $0x48] sm:$0xff] %v1322
        %1353 = vst [vmem:[#allocation2 + $0x50] sm:$0xff] %v1323
        %1354 = vst [vmem:[#allocation2 + $0x58] sm:$0xff] %v1324
        %1355 = vst [vmem:[#allocation2 + $0x60] sm:$0xff] %v1325
        %1356 = vst [vmem:[#allocation2 + $0x68] sm:$0xff] %v1326
        %1357 = vst [vmem:[#allocation2 + $0x70] sm:$0xff] %v1327
        %1358 = vst [vmem:[#allocation2 + $0x78] sm:$0xff] %v1328
        %1359 = vst [vmem:[#allocation2 + $0x80] sm:$0xff] %v1329
        %1360 = vst [vmem:[#allocation2 + $0x88] sm:$0xff] %v1330
        %1361 = vst [vmem:[#allocation2 + $0x90] sm:$0xff] %v1331
        %1362 = vst [vmem:[#allocation2 + $0x98] sm:$0xff] %v1332
        %1363 = vst [vmem:[#allocation2 + $0xa0] sm:$0xff] %v1333
        %1364 = vst [vmem:[#allocation2 + $0xa8] sm:$0xff] %v1334
        %1365 = vst [vmem:[#allocation2 + $0xb0] sm:$0xff] %v1335
        %1366 = vst [vmem:[#allocation2 + $0xb8] sm:$0xff] %v1336
        %1367 = vst [vmem:[#allocation2 + $0xc0] sm:$0xff] %v1337
        %1368 = vst [vmem:[#allocation2 + $0xc8] sm:$0xff] %v1338
        %1369 = vst [vmem:[#allocation2 + $0xd0] sm:$0xff] %v1339
        %1370 = vst [vmem:[#allocation2 + $0xd8] sm:$0xff] %v1340
        %1371 = vst [vmem:[#allocation2 + $0xe0] sm:$0xff] %v1341
        %1372 = vst [vmem:[#allocation2 + $0xe8] sm:$0xff] %v1342
        %v1373 = vld [vmem:[#allocation2] sm:$0xff]
        %v1374 = vld [vmem:[#allocation2 + $0x8] sm:$0xff]
        %v1375 = vld [vmem:[%s350] sm:$0xff]
        %v1376 = vld [vmem:[%s350 + $0x8] sm:$0xff]
        %v1377 = vmul.f32 %v1375, %v917
        %v1378 = vmul.f32 %v1376, %v917
        %v1379 = vrot.slane %v1375, 7
        %v1380 = vrot.slane %v1376, 7
        %v1381 = vsel %vm519, %v1379, %v1380
        %v1382 = vsel %vm519, %v1380, %v1379
        %v1383 = vsel %vm554, %v1382, 0.0
        %v1384 = vsel %vm555, %v1381, 0.0
        %v1385 = vmul.f32 %v1383, %v948
        %v1386 = vmul.f32 %v1384, %v948
        %v1387 = vadd.f32 %v1377, %v1385
        %v1388 = vadd.f32 %v1378, %v1386
        %v1389 = vrot.slane %v1375, 1
        %v1390 = vrot.slane %v1376, 1
        %v1391 = vsel %vm685, %v1389, %v1390
        %v1392 = vsel %vm685, %v1390, %v1389
        %v1393 = vsel %vm720, %v1391, 0.0
        %v1394 = vsel %vm721, %v1392, 0.0
        %v1395 = vmul.f32 %v1393, %v1009
        %v1396 = vmul.f32 %v1394, %v1009
        %v1397 = vadd.f32 %v1387, %v1395
        %v1398 = vadd.f32 %v1388, %v1396
        %v1399 = vadd.f32 %v1373, %v1397
        %v1400 = vadd.f32 %v1374, %v1398
        %1401 = vst [vmem:[#allocation2] sm:$0xff] %v1399
        %1402 = vst [vmem:[#allocation2 + $0x8] sm:$0xff] %v1400
        %s1403 = scalar_lea.vmem [#allocation2], 240
        %v1404 = vld [vmem:[%s1403] sm:$0xff]
        %v1405 = vld [vmem:[%s1403 + $0x8] sm:$0xff]
        %v1406 = vld [vmem:[%s360] sm:$0xff]
        %v1407 = vld [vmem:[%s360 + $0x8] sm:$0xff]
        %v1408 = vmul.f32 %v1406, %v1160
        %v1409 = vmul.f32 %v1407, %v1160
        %v1410 = vrot.slane %v1406, 7
        %v1411 = vrot.slane %v1407, 7
        %v1412 = vsel %vm519, %v1410, %v1411
        %v1413 = vsel %vm519, %v1411, %v1410
        %v1414 = vsel %vm554, %v1413, 0.0
        %v1415 = vsel %vm555, %v1412, 0.0
        %v1416 = vmul.f32 %v1414, %v1191
        %v1417 = vmul.f32 %v1415, %v1191
        %v1418 = vadd.f32 %v1408, %v1416
        %v1419 = vadd.f32 %v1409, %v1417
        %v1420 = vrot.slane %v1406, 1
        %v1421 = vrot.slane %v1407, 1
        %v1422 = vsel %vm685, %v1420, %v1421
        %v1423 = vsel %vm685, %v1421, %v1420
        %v1424 = vsel %vm720, %v1422, 0.0
        %v1425 = vsel %vm721, %v1423, 0.0
        %v1426 = vmul.f32 %v1424, %v1252
        %v1427 = vmul.f32 %v1425, %v1252
        %v1428 = vadd.f32 %v1418, %v1426
        %v1429 = vadd.f32 %v1419, %v1427
        %v1430 = vadd.f32 %v1404, %v1428
        %v1431 = vadd.f32 %v1405, %v1429
        %1432 = vst [vmem:[%s1403] sm:$0xff] %v1430
        %1433 = vst [vmem:[%s1403 + $0x8] sm:$0xff] %v1431
        %v1434 = vld [vmem:[#allocation2] sm:$0xff]
        %v1435 = vld [vmem:[#allocation2 + $0x8] sm:$0xff]
        %v1436 = vld [vmem:[#allocation2 + $0x10] sm:$0xff]
        %v1437 = vld [vmem:[#allocation2 + $0x18] sm:$0xff]
        %v1438 = vld [vmem:[#allocation2 + $0x20] sm:$0xff]
        %v1439 = vld [vmem:[#allocation2 + $0x28] sm:$0xff]
        %v1440 = vld [vmem:[#allocation2 + $0x30] sm:$0xff]
        %v1441 = vld [vmem:[#allocation2 + $0x38] sm:$0xff]
        %v1442 = vld [vmem:[#allocation2 + $0x40] sm:$0xff]
        %v1443 = vld [vmem:[#allocation2 + $0x48] sm:$0xff]
        %v1444 = vld [vmem:[#allocation2 + $0x50] sm:$0xff]
        %v1445 = vld [vmem:[#allocation2 + $0x58] sm:$0xff]
        %v1446 = vld [vmem:[#allocation2 + $0x60] sm:$0xff]
        %v1447 = vld [vmem:[#allocation2 + $0x68] sm:$0xff]
        %v1448 = vld [vmem:[#allocation2 + $0x70] sm:$0xff]
        %v1449 = vld [vmem:[#allocation2 + $0x78] sm:$0xff]
        %v1450 = vld [vmem:[#allocation2 + $0x80] sm:$0xff]
        %v1451 = vld [vmem:[#allocation2 + $0x88] sm:$0xff]
        %v1452 = vld [vmem:[#allocation2 + $0x90] sm:$0xff]
        %v1453 = vld [vmem:[#allocation2 + $0x98] sm:$0xff]
        %v1454 = vld [vmem:[#allocation2 + $0xa0] sm:$0xff]
        %v1455 = vld [vmem:[#allocation2 + $0xa8] sm:$0xff]
        %v1456 = vld [vmem:[#allocation2 + $0xb0] sm:$0xff]
        %v1457 = vld [vmem:[#allocation2 + $0xb8] sm:$0xff]
        %v1458 = vld [vmem:[#allocation2 + $0xc0] sm:$0xff]
        %v1459 = vld [vmem:[#allocation2 + $0xc8] sm:$0xff]
        %v1460 = vld [vmem:[#allocation2 + $0xd0] sm:$0xff]
        %v1461 = vld [vmem:[#allocation2 + $0xd8] sm:$0xff]
        %v1462 = vld [vmem:[#allocation2 + $0xe0] sm:$0xff]
        %v1463 = vld [vmem:[#allocation2 + $0xe8] sm:$0xff]
        %v1464 = vld [vmem:[#allocation2 + $0xf0] sm:$0xff]
        %v1465 = vld [vmem:[#allocation2 + $0xf8] sm:$0xff]
        %1466 = vst [vmem:[%s405] sm:$0xff] %v1434
        %1467 = vst [vmem:[%s405 + $0x8] sm:$0xff] %v1435
        %1468 = vst [vmem:[%s405 + $0x10] sm:$0xff] %v1436
        %1469 = vst [vmem:[%s405 + $0x18] sm:$0xff] %v1437
        %1470 = vst [vmem:[%s405 + $0x20] sm:$0xff] %v1438
        %1471 = vst [vmem:[%s405 + $0x28] sm:$0xff] %v1439
        %1472 = vst [vmem:[%s405 + $0x30] sm:$0xff] %v1440
        %1473 = vst [vmem:[%s405 + $0x38] sm:$0xff] %v1441
        %1474 = vst [vmem:[%s405 + $0x40] sm:$0xff] %v1442
        %1475 = vst [vmem:[%s405 + $0x48] sm:$0xff] %v1443
        %1476 = vst [vmem:[%s405 + $0x50] sm:$0xff] %v1444
        %1477 = vst [vmem:[%s405 + $0x58] sm:$0xff] %v1445
        %1478 = vst [vmem:[%s405 + $0x60] sm:$0xff] %v1446
        %1479 = vst [vmem:[%s405 + $0x68] sm:$0xff] %v1447
        %1480 = vst [vmem:[%s405 + $0x70] sm:$0xff] %v1448
        %1481 = vst [vmem:[%s405 + $0x78] sm:$0xff] %v1449
        %1482 = vst [vmem:[%s405 + $0x80] sm:$0xff] %v1450
        %1483 = vst [vmem:[%s405 + $0x88] sm:$0xff] %v1451
        %1484 = vst [vmem:[%s405 + $0x90] sm:$0xff] %v1452
        %1485 = vst [vmem:[%s405 + $0x98] sm:$0xff] %v1453
        %1486 = vst [vmem:[%s405 + $0xa0] sm:$0xff] %v1454
        %1487 = vst [vmem:[%s405 + $0xa8] sm:$0xff] %v1455
        %1488 = vst [vmem:[%s405 + $0xb0] sm:$0xff] %v1456
        %1489 = vst [vmem:[%s405 + $0xb8] sm:$0xff] %v1457
        %1490 = vst [vmem:[%s405 + $0xc0] sm:$0xff] %v1458
        %1491 = vst [vmem:[%s405 + $0xc8] sm:$0xff] %v1459
        %1492 = vst [vmem:[%s405 + $0xd0] sm:$0xff] %v1460
        %1493 = vst [vmem:[%s405 + $0xd8] sm:$0xff] %v1461
        %1494 = vst [vmem:[%s405 + $0xe0] sm:$0xff] %v1462
        %1495 = vst [vmem:[%s405 + $0xe8] sm:$0xff] %v1463
        %1496 = vst [vmem:[%s405 + $0xf0] sm:$0xff] %v1464
        %1497 = vst [vmem:[%s405 + $0xf8] sm:$0xff] %v1465
        %s1498 = sand.u32 %s199, 1
        %s1499 = scalar_lea.sflag [#allocation5], %s1498
        %s1500 = sand.u32 %s199, 1
        %s1501 = smul.addr %s1500, 256
        %s1502 = scalar_lea.vmem [#allocation11], %s1501
        // Predicated region
        $region57: #{tpu_custom_call.1} parent=39 // pred_check
          %p1503 = pneg %p209
        $region58: #{tpu_custom_call.1} parent=39 // pred_check_branch
          %1505 = sbr.rel (%p1503) target = $region60
        $region59: #{tpu_custom_call.1} parent=39 // pred_region
          %s1506 = smul.u32 16, %s33
          %1508 = vsyncadd %s1499, 0
          %s1509 = smul.addr %s1506, 2
          %s1510 = sadd.s32 %s31, %s1509
          %s1511 = smul.addr %s32, 32
          %s1512 = sadd.s32 %s1510, %s1511
          %s1513 = smul.addr %s1512, 8
          %s1514 = scalar_lea.hbm %s5, %s1513
          %s1515 = sshll.u32 %s1502, 4
          %s1516 = int_to_ptr.vmem [resolvable:$true] %s1515
          %s1517 = sshll.u32 %s1514, 4
          %s1518 = int_to_ptr.hbm [resolvable:$true] %s1517
          %1523 = dma.vmem_to_hbm [thread:$0]  %s1516, 4096, %s1518, %s1499, 128, 128, 8
        $region60: #{tpu_custom_call.1} parent=39 // pred_fallthru
          _
      $region40: #{tpu_custom_call.1} parent=5 // pred_fallthru
        _
      %p1524 = scmp.le.s32.totalorder 2, %s21
      // Predicated region
      $region61: #{tpu_custom_call.1} parent=5 // pred_check
        %p1525 = pneg %p1524
      $region62: #{tpu_custom_call.1} parent=5 // pred_check_branch
        %1527 = sbr.rel (%p1525) target = $region64
      $region63: #{tpu_custom_call.1} parent=5 // pred_region
        %s1528 = ssub.s32 %s21, 2
        // Predicated region
        $region65: #{tpu_custom_call.1} parent=63 // pred_check
          %p1529 = pneg %p215
        $region66: #{tpu_custom_call.1} parent=63 // pred_check_branch
          %1531 = sbr.rel (%p1529) target = $region68
        $region67: #{tpu_custom_call.1} parent=63 // pred_region
          %s1532 = sand.u32 %s200, 1
          %s1533 = scalar_lea.sflag [#allocation5], %s1532
          %s1534 = sand.u32 %s200, 1
          %s1535 = smul.addr %s1534, 256
          %s1536 = scalar_lea.vmem [#allocation11], %s1535
          %1538 = dma.done %s1533, 4096
        $region68: #{tpu_custom_call.1} parent=63 // pred_fallthru
          _
      $region64: #{tpu_custom_call.1} parent=5 // pred_fallthru
        _
    $region6: #{tpu_custom_call.1} parent=1 // loop_footer
      %s25 = sadd.s32 1, %s21
    $region7: #{tpu_custom_call.1} parent=1 // loop_footer_branch
      %20 = sbr.rel target = $region3
    $region8: #{tpu_custom_call.1} parent=1 // loop_exit
      _
    %1539 = vsyncpa [#allocation4], 1
    %s1540 = scalar_lea.sflag [#allocation4], 1
    %1541 = vsyncpa %s1540, 1
    %1542 = vsyncpa [#allocation7], 1
    %s1543 = scalar_lea.sflag [#allocation7], 1
    %1544 = vsyncpa %s1543, 1
    %1545 = vsyncpa [#allocation10], 1
    %1546 = vsyncpa [#allocation5], 1
    %s1547 = scalar_lea.sflag [#allocation5], 1
    %1548 = vsyncpa %s1547, 1

</llo_original>
